<compile_context>
chip_gen: v5e
topology: v5e:2x2
jax: 0.10.0
libtpu: 0.0.40
codegen_flags: <defaults>
</compile_context>

<pallas_src>
import math

import jax
import jax.numpy as jnp
from jax.experimental import pallas as pl
from jax.experimental.pallas import tpu as pltpu


def _wavelet_kernel(x_ref, freq4_ref, phase4_ref, ndsq_ref, o_ref):
    # x_ref:                           (tile, f_in)      float32
    # freq4_ref/phase4_ref/ndsq_ref:   (1, f_in*f_out)   float32 (f_out fastest)
    # o_ref:                           (tile, f_in*f_out)
    tile, f_in = x_ref.shape
    F = o_ref.shape[-1]
    f_out = F // f_in

    # One transcendental per *input* element (EUP, separate issue slot).
    e = jnp.exp(-x_ref[...])                                   # (tile, f_in)

    # Single lane-dense expansion (tile, f_in) -> (tile, f_in*f_out), with
    # f_out fastest — identical element order to torch's .view(..., F), so the
    # wrapper-side reshape is free.  One relayout; all math after this runs on
    # full 128-lane vregs.
    e_rep = jnp.broadcast_to(e[:, :, None], (tile, f_in, f_out)).reshape(tile, F)

    # phi = sin(4*(e*freq + phase)) * exp(-(((|scale|+eps)*e)**2)); the constant
    # factors were folded into freq4 / phase4 / ndsq in the wrapper.
    phi = jnp.sin(e_rep * freq4_ref[...] + phase4_ref[...]) * jnp.exp(
        ndsq_ref[...] * (e_rep * e_rep))

    o_ref[...] = phi.astype(o_ref.dtype)


def wavelet_forward(raw_inp, frequencies, phases, scales, eps=0.4,
                    tile_n=1024, out_dtype=None,
                    vmem_budget_bytes=20 * 1024 * 1024):
    """raw_inp: (..., in_features). Params: (in_features, out_features) float32.

    out_dtype: None -> raw_inp.dtype (matches PyTorch f32 numerics). Pass
    jnp.bfloat16 to halve HBM writes when the kernel is mem-bound (v5e/v6e).
    """
    f_in, f_out = frequencies.shape
    assert raw_inp.shape[-1] == f_in
    F = f_in * f_out
    lead_shape = raw_inp.shape[:-1]
    out_dtype = raw_inp.dtype if out_dtype is None else out_dtype

    # Hoisted constant parameter math, flattened f_out-fastest (same memory
    # order as the output view, so no in-kernel transpose is ever needed).
    freq4 = (4.0 * frequencies).reshape(1, F).astype(jnp.float32)
    phase4 = (4.0 * phases).reshape(1, F).astype(jnp.float32)
    ndsq = (-((jnp.abs(scales) + eps) ** 2)).reshape(1, F).astype(jnp.float32)

    x2d = raw_inp.reshape(-1, f_in).astype(jnp.float32)
    n = x2d.shape[0]

    # ---- tile-size selection -------------------------------------------------
    # out block (double-buffered) + ~4 f32 intermediates + x block (double-buffered)
    out_bytes = jnp.dtype(out_dtype).itemsize
    bytes_per_row = F * out_bytes * 2 + F * 4 * 4 + f_in * 4 * 2
    vmem_cap = max(8, (vmem_budget_bytes // bytes_per_row) // 8 * 8)
    # keep >= ~4 grid steps so v7x's 2 TensorCores both get work
    grid_cap = max(8, pl.cdiv(pl.cdiv(n, 4), 8) * 8)
    tile = int(min(tile_n, vmem_cap, grid_cap))
    tile = max(8, (tile // 8) * 8)

    n_pad = pl.cdiv(n, tile) * tile
    if n_pad != n:
        # TODO(synk): a masked tail block would avoid this pad + the out[:n]
        # slice for ragged N; with the adaptive tile this triggers rarely.
        x2d = jnp.pad(x2d, ((0, n_pad - n), (0, 0)))

    # NOTE: if F is not a multiple of 128, output stores become masked
    # (perf only, still correct). F = 128 in the demo -> unmasked lane-dense vst.
    out = pl.pallas_call(
        _wavelet_kernel,
        out_shape=jax.ShapeDtypeStruct((n_pad, F), out_dtype),
        grid_spec=pltpu.PrefetchScalarGridSpec(
            num_scalar_prefetch=0,
            grid=(n_pad // tile,),
            in_specs=[
                pl.BlockSpec((tile, f_in), lambda i: (i, 0)),
                pl.BlockSpec((1, F), lambda i: (0, 0)),
                pl.BlockSpec((1, F), lambda i: (0, 0)),
                pl.BlockSpec((1, F), lambda i: (0, 0)),
            ],
            out_specs=pl.BlockSpec((tile, F), lambda i: (i, 0)),
        ),
        compiler_params=pltpu.CompilerParams(
            dimension_semantics=("parallel",),
            vmem_limit_bytes=32 * 1024 * 1024,
        ),
        cost_estimate=pl.CostEstimate(
            flops=6 * n_pad * F,
            transcendentals=2 * n_pad * F,
            bytes_accessed=n_pad * f_in * 4 + n_pad * F * int(out_bytes) + 3 * F * 4,
        ),
    )(x2d, freq4, phase4, ndsq)

    if n_pad != n:
        out = out[:n]
    return out.reshape(*lead_shape, F)


def init_wavelet_params(key, in_features, out_features):
    """Mirror of WaveLet.__init__ parameter construction (shapes / ranges)."""
    k1, k2, k3 = jax.random.split(key, 3)
    frequencies = jax.random.uniform(k1, (in_features, out_features),
                                     dtype=jnp.float32) * 8.0 * math.pi / 4.0
    phases = jax.random.uniform(k2, (in_features, out_features),
                                dtype=jnp.float32) * 2.0 * math.pi / 4.0
    scales = jax.random.uniform(k3, (in_features, out_features),
                                dtype=jnp.float32) * 2.0
    return frequencies, phases, scales


def wavelet_reference(raw_inp, frequencies, phases, scales, eps=0.4):
    """Pure-JAX reference mirroring the PyTorch forward exactly."""
    x = raw_inp[..., None]
    e = jnp.exp(-x)
    phi = jnp.sin(4.0 * (e * frequencies + phases)) * \
        jnp.exp(-((jnp.abs(scales) + eps) * e) ** 2)
    return phi.reshape(*raw_inp.shape[:-1], -1)


if __name__ == "__main__":
    in_features = 8
    out_features = 16
    eps = 0.4

    key = jax.random.PRNGKey(0)
    kp, kx = jax.random.split(key)
    frequencies, phases, scales = init_wavelet_params(kp, in_features, out_features)

    # small input: batch=2, seq=64, features=in_features -> 128 rows, 4 grid steps
    raw_inp = jax.random.normal(kx, (2, 64, in_features), dtype=jnp.float32)

    out = wavelet_forward(raw_inp, frequencies, phases, scales, eps=eps)
    out = jax.block_until_ready(out)

    ref = wavelet_reference(raw_inp, frequencies, phases, scales, eps=eps)
    assert out.shape == (2, 64, in_features * out_features)
    # tolerance covers the (mathematically equivalent) re-association of the
    # hoisted constants: sin(e*4f + 4p) vs sin(4*(e*f + p)), etc.
    assert jnp.allclose(out, ref, atol=1e-4, rtol=1e-4), "mismatch vs reference"

    print("KERNEL_OK")
</pallas_src>

<mosaic_0001>
module attributes {stable_mosaic.version = 11 : i64} {
  func.func @_wavelet_kernel(%arg0: i32, %arg1: memref<32x8xf32, #tpu.memory_space<vmem>>, %arg2: memref<1x128xf32, #tpu.memory_space<vmem>>, %arg3: memref<1x128xf32, #tpu.memory_space<vmem>>, %arg4: memref<1x128xf32, #tpu.memory_space<vmem>>, %arg5: memref<32x128xf32, #tpu.memory_space<vmem>>) attributes {dimension_semantics = [#tpu.dimension_semantics<parallel>], iteration_bounds = array<i64: 4>, scalar_prefetch = 0 : i64, scratch_operands = 0 : i64, tpu.core_type = #tpu.core_type<tc>, window_params = [{transform_indices = @transform_0, window_bounds = array<i64: 32, 8>}, {pipeline_mode = #tpu.pipeline_mode<synchronous>, transform_indices = @transform_1, window_bounds = array<i64: 1, 128>}, {pipeline_mode = #tpu.pipeline_mode<synchronous>, transform_indices = @transform_2, window_bounds = array<i64: 1, 128>}, {pipeline_mode = #tpu.pipeline_mode<synchronous>, transform_indices = @transform_3, window_bounds = array<i64: 1, 128>}, {transform_indices = @transform_4, window_bounds = array<i64: 32, 128>}]} {
    %c0 = arith.constant 0 : index
    %c0_0 = arith.constant 0 : index
    %0 = vector.load %arg1[%c0, %c0_0] : memref<32x8xf32, #tpu.memory_space<vmem>>, vector<32x8xf32>
    %cst = arith.constant 0.000000e+00 : f32
    %1 = vector.broadcast %cst : f32 to vector<32x8xf32>
    %2 = arith.subf %1, %0 : vector<32x8xf32>
    %3 = math.exp %2 : vector<32x8xf32>
    %4 = vector.shape_cast %3 : vector<32x8xf32> to vector<32x8x1xf32>
    %5 = vector.shape_cast %4 : vector<32x8x1xf32> to vector<32x8x1xf32>
    %6 = vector.broadcast %5 : vector<32x8x1xf32> to vector<32x8x16xf32>
    %7 = vector.shape_cast %6 : vector<32x8x16xf32> to vector<32x128xf32>
    %c0_1 = arith.constant 0 : index
    %c0_2 = arith.constant 0 : index
    %8 = vector.load %arg2[%c0_1, %c0_2] : memref<1x128xf32, #tpu.memory_space<vmem>>, vector<1x128xf32>
    %9 = vector.broadcast %8 : vector<1x128xf32> to vector<32x128xf32>
    %10 = arith.mulf %7, %9 : vector<32x128xf32>
    %c0_3 = arith.constant 0 : index
    %c0_4 = arith.constant 0 : index
    %11 = vector.load %arg3[%c0_3, %c0_4] : memref<1x128xf32, #tpu.memory_space<vmem>>, vector<1x128xf32>
    %12 = vector.broadcast %11 : vector<1x128xf32> to vector<32x128xf32>
    %13 = arith.addf %10, %12 : vector<32x128xf32>
    %14 = math.sin %13 : vector<32x128xf32>
    %c0_5 = arith.constant 0 : index
    %c0_6 = arith.constant 0 : index
    %15 = vector.load %arg4[%c0_5, %c0_6] : memref<1x128xf32, #tpu.memory_space<vmem>>, vector<1x128xf32>
    %16 = arith.mulf %7, %7 : vector<32x128xf32>
    %17 = vector.broadcast %15 : vector<1x128xf32> to vector<32x128xf32>
    %18 = arith.mulf %17, %16 : vector<32x128xf32>
    %19 = math.exp %18 : vector<32x128xf32>
    %20 = arith.mulf %14, %19 : vector<32x128xf32>
    %c0_7 = arith.constant 0 : index
    %c0_8 = arith.constant 0 : index
    %21 = vector.load %arg5[%c0_7, %c0_8] : memref<32x128xf32, #tpu.memory_space<vmem>>, vector<32x128xf32>
    tpu.vector_store %arg5[%c0_7, %c0_8], %20 {strides = array<i32>} : memref<32x128xf32, #tpu.memory_space<vmem>>, vector<32x128xf32>,
    return
  }
  func.func @transform_0(%arg0: i32) -> (i32, i32) {
    %c0_i32 = arith.constant 0 : i32
    %c0_i32_0 = arith.constant 0 : i32
    return %arg0, %c0_i32 : i32, i32
  }
  func.func @transform_1(%arg0: i32) -> (i32, i32) {
    %c0_i32 = arith.constant 0 : i32
    %c0_i32_0 = arith.constant 0 : i32
    %c0_i32_1 = arith.constant 0 : i32
    return %c0_i32, %c0_i32_0 : i32, i32
  }
  func.func @transform_2(%arg0: i32) -> (i32, i32) {
    %c0_i32 = arith.constant 0 : i32
    %c0_i32_0 = arith.constant 0 : i32
    %c0_i32_1 = arith.constant 0 : i32
    return %c0_i32, %c0_i32_0 : i32, i32
  }
  func.func @transform_3(%arg0: i32) -> (i32, i32) {
    %c0_i32 = arith.constant 0 : i32
    %c0_i32_0 = arith.constant 0 : i32
    %c0_i32_1 = arith.constant 0 : i32
    return %c0_i32, %c0_i32_0 : i32, i32
  }
  func.func @transform_4(%arg0: i32) -> (i32, i32) {
    %c0_i32 = arith.constant 0 : i32
    %c0_i32_0 = arith.constant 0 : i32
    return %arg0, %c0_i32 : i32, i32
  }
}

</mosaic_0001>

<llo_original>
// kernel: tpu_custom_call.1
$region0: #{tpu_custom_call.1}
  #allocation0 [shape = 'u32[]', space=smem, size = 0x4, offset = 0x4, fixed_abs, tag = 'smem constant byte address 0x4 - core index']
  #allocation1 [shape = 'u32[72,128]{1,0:T(1,128)}', space=vmem, size = 0x9000, scoped, tag = 'internal scratch']
  %s0 = inlined_call_operand.vmem [shape: f32[128,8], index: 0, kind: input, shape index: {}]
  %s1 = inlined_call_operand.vmem [shape: f32[1,128], index: 1, kind: input, shape index: {}]
  %s2 = inlined_call_operand.vmem [shape: f32[1,128], index: 2, kind: input, shape index: {}]
  %s3 = inlined_call_operand.vmem [shape: f32[1,128], index: 3, kind: input, shape index: {}]
  %s4 = inlined_call_operand.hbm [shape: f32[128,128], index: 4, kind: output, shape index: {}]
  %s5 = sld [smem:[#allocation0]]
  $region49: #{tpu_custom_call.1} parent=0
    _
  %s7 = ssub.s32 1, %s5
  %s8 = scalar_select 0, %s7, %s5
  $region1: #{tpu_custom_call.1} parent=0
    #allocation2 [shape = 'u8[32768]{0}', space=vmem, size = 0x8000, scoped, tag = 'output window, operand 0']
    #allocation3 [shape = 's32[2]{0}', space=sflag, size = 0x8, scoped, tag = 'scoped memory for tpu_custom_call.1']
    %9 = vsyncpa [#allocation3], 0
    %s10 = scalar_lea.sflag [#allocation3], 1
    %11 = vsyncpa %s10, 0
    loop: start=0, step=1, limit=6
    $region2: #{tpu_custom_call.1} parent=1 // loop_pre_header
      _
    $region3: #{tpu_custom_call.1} parent=1 // loop_header
      %s13 = sphi 0, %s17
      %p14 = scmp.ge.s32.totalorder %s13, 6
      %s23 = sphi 0, %s25
      %s26 = sphi 0, %s23
      %s27 = sphi 0, %s26
      %s43 = sphi 0, %s27
      %s47 = sphi 0, %s47
      %s49 = sphi 0, %s47
      %s50 = sphi 0, %s49
      %s64 = sphi 0, %s50
      %s68 = sphi 0, %s68
      %s70 = sphi 0, %s68
      %s71 = sphi 0, %s70
      %s85 = sphi 0, %s71
      %s89 = sphi 0, %s89
      %s91 = sphi 0, %s89
      %s92 = sphi 0, %s91
      %s106 = sphi 0, %s92
      %s112 = sphi 0, %s114
      %s115 = sphi 0, %s112
      %s116 = sphi 0, %s115
      %s132 = sphi 0, %s116
    $region4: #{tpu_custom_call.1} parent=1 // loop_header_branch
      %16 = sbr.rel (%p14) target = $region8
    $region5: #{tpu_custom_call.1} parent=1 // loop_body
      %s18 = ssub.s32 %s13, 1
      %s19 = ssub.s32 %s13, 2
      %s20 = sadd.s32 %s13, 1
      %s21 = ssub.s32 %s13, %s20
      %p22 = scmp.eq.s32.totalorder %s21, 0
      %s24 = sadd.s32 %s23, 1
      %s25 = scalar_select %p22, %s23, %s24
      %p28 = pneg %p22
      %p29 = scmp.eq.s32.totalorder %s13, 3
      %p30 = por %p28, %p29
      %p31 = scmp.ne.s32.totalorder %s23, %s26
      %p32 = scmp.eq.s32.totalorder %s13, 0
      %p33 = por %p31, %p32
      %p34 = scmp.ne.s32.totalorder %s23, %s26
      %p35 = scmp.eq.s32.totalorder %s18, 3
      %p36 = por %p34, %p35
      %p37 = scmp.ne.s32.totalorder %s26, %s27
      %p38 = scmp.eq.s32.totalorder %s18, 0
      %p39 = por %p37, %p38
      %p40 = scmp.ne.s32.totalorder %s26, %s27
      %p41 = scmp.eq.s32.totalorder %s19, 3
      %p42 = por %p40, %p41
      %p44 = scmp.ne.s32.totalorder %s27, %s43
      %p45 = scmp.eq.s32.totalorder %s19, 0
      %p46 = por %p44, %p45
      %s48 = sadd.s32 %s47, 1
      %p51 = scmp.eq.s32.totalorder %s13, 3
      %p52 = scmp.ne.s32.totalorder %s47, %s49
      %p53 = scmp.eq.s32.totalorder %s13, 0
      %p54 = por %p52, %p53
      %p55 = scmp.ne.s32.totalorder %s47, %s49
      %p56 = scmp.eq.s32.totalorder %s18, 3
      %p57 = por %p55, %p56
      %p58 = scmp.ne.s32.totalorder %s49, %s50
      %p59 = scmp.eq.s32.totalorder %s18, 0
      %p60 = por %p58, %p59
      %p61 = scmp.ne.s32.totalorder %s49, %s50
      %p62 = scmp.eq.s32.totalorder %s19, 3
      %p63 = por %p61, %p62
      %p65 = scmp.ne.s32.totalorder %s50, %s64
      %p66 = scmp.eq.s32.totalorder %s19, 0
      %p67 = por %p65, %p66
      %s69 = sadd.s32 %s68, 1
      %p72 = scmp.eq.s32.totalorder %s13, 3
      %p73 = scmp.ne.s32.totalorder %s68, %s70
      %p74 = scmp.eq.s32.totalorder %s13, 0
      %p75 = por %p73, %p74
      %p76 = scmp.ne.s32.totalorder %s68, %s70
      %p77 = scmp.eq.s32.totalorder %s18, 3
      %p78 = por %p76, %p77
      %p79 = scmp.ne.s32.totalorder %s70, %s71
      %p80 = scmp.eq.s32.totalorder %s18, 0
      %p81 = por %p79, %p80
      %p82 = scmp.ne.s32.totalorder %s70, %s71
      %p83 = scmp.eq.s32.totalorder %s19, 3
      %p84 = por %p82, %p83
      %p86 = scmp.ne.s32.totalorder %s71, %s85
      %p87 = scmp.eq.s32.totalorder %s19, 0
      %p88 = por %p86, %p87
      %s90 = sadd.s32 %s89, 1
      %p93 = scmp.eq.s32.totalorder %s13, 3
      %p94 = scmp.ne.s32.totalorder %s89, %s91
      %p95 = scmp.eq.s32.totalorder %s13, 0
      %p96 = por %p94, %p95
      %p97 = scmp.ne.s32.totalorder %s89, %s91
      %p98 = scmp.eq.s32.totalorder %s18, 3
      %p99 = por %p97, %p98
      %p100 = scmp.ne.s32.totalorder %s91, %s92
      %p101 = scmp.eq.s32.totalorder %s18, 0
      %p102 = por %p100, %p101
      %p103 = scmp.ne.s32.totalorder %s91, %s92
      %p104 = scmp.eq.s32.totalorder %s19, 3
      %p105 = por %p103, %p104
      %p107 = scmp.ne.s32.totalorder %s92, %s106
      %p108 = scmp.eq.s32.totalorder %s19, 0
      %p109 = por %p107, %p108
      %s110 = ssub.s32 %s13, %s20
      %p111 = scmp.eq.s32.totalorder %s110, 0
      %s113 = sadd.s32 %s112, 1
      %s114 = scalar_select %p111, %s112, %s113
      %p117 = pneg %p111
      %p118 = scmp.eq.s32.totalorder %s13, 3
      %p119 = por %p117, %p118
      %p120 = scmp.ne.s32.totalorder %s112, %s115
      %p121 = scmp.eq.s32.totalorder %s13, 0
      %p122 = por %p120, %p121
      %p123 = scmp.ne.s32.totalorder %s112, %s115
      %p124 = scmp.eq.s32.totalorder %s18, 3
      %p125 = por %p123, %p124
      %p126 = scmp.ne.s32.totalorder %s115, %s116
      %p127 = scmp.eq.s32.totalorder %s18, 0
      %p128 = por %p126, %p127
      %p129 = scmp.ne.s32.totalorder %s115, %s116
      %p130 = scmp.eq.s32.totalorder %s19, 3
      %p131 = por %p129, %p130
      %p133 = scmp.ne.s32.totalorder %s116, %s132
      %p134 = scmp.eq.s32.totalorder %s19, 0
      %p135 = por %p133, %p134
      %p136 = scmp.le.s32.totalorder 1, %s13
      %p137 = scmp.lt.s32.totalorder %s13, 5
      %p138 = pnand %p136, %p137
      %p139 = pneg %p138
      // Predicated region
      $region9: #{tpu_custom_call.1} parent=5 // pred_check
        _
      $region10: #{tpu_custom_call.1} parent=5 // pred_check_branch
        %141 = sbr.rel (%p138) target = $region12
      $region11: #{tpu_custom_call.1} parent=5 // pred_region
        %s142 = ssub.s32 %s13, 1
        // Predicated region
        $region13: #{tpu_custom_call.1} parent=11 // pred_check
          %p143 = pneg %p60
        $region14: #{tpu_custom_call.1} parent=11 // pred_check_branch
          %145 = sbr.rel (%p143) target = $region16
        $region15: #{tpu_custom_call.1} parent=11 // pred_region
          _
        $region16: #{tpu_custom_call.1} parent=11 // pred_fallthru
          _
        // Predicated region
        $region17: #{tpu_custom_call.1} parent=11 // pred_check
          %p146 = pneg %p81
        $region18: #{tpu_custom_call.1} parent=11 // pred_check_branch
          %148 = sbr.rel (%p146) target = $region20
        $region19: #{tpu_custom_call.1} parent=11 // pred_region
          _
        $region20: #{tpu_custom_call.1} parent=11 // pred_fallthru
          _
        // Predicated region
        $region21: #{tpu_custom_call.1} parent=11 // pred_check
          %p149 = pneg %p102
        $region22: #{tpu_custom_call.1} parent=11 // pred_check_branch
          %151 = sbr.rel (%p149) target = $region24
        $region23: #{tpu_custom_call.1} parent=11 // pred_region
          _
        $region24: #{tpu_custom_call.1} parent=11 // pred_fallthru
          _
      $region12: #{tpu_custom_call.1} parent=5 // pred_fallthru
        _
      %p152 = scmp.lt.s32.totalorder %s13, 4
      // Predicated region
      $region25: #{tpu_custom_call.1} parent=5 // pred_check
        %p153 = pneg %p152
      $region26: #{tpu_custom_call.1} parent=5 // pred_check_branch
        %155 = sbr.rel (%p153) target = $region28
      $region27: #{tpu_custom_call.1} parent=5 // pred_region
        // Predicated region
        $region29: #{tpu_custom_call.1} parent=27 // pred_check
          %p156 = pneg %p33
        $region30: #{tpu_custom_call.1} parent=27 // pred_check_branch
          %158 = sbr.rel (%p156) target = $region32
        $region31: #{tpu_custom_call.1} parent=27 // pred_region
          %s159 = smul.u32 4, %s13
          %p160 = scmp.lt.s32.totalorder %s159, 15
          %s161 = scalar_select %p160, %s159, 15
          %s162 = smul.addr %s161, 8
          %s163 = scalar_lea.vmem %s0, %s162
          %s164 = smul.u32 4, %s13
        $region32: #{tpu_custom_call.1} parent=27 // pred_fallthru
          _
      $region28: #{tpu_custom_call.1} parent=5 // pred_fallthru
        _
      %p165 = scmp.le.s32.totalorder 1, %s13
      %p166 = scmp.lt.s32.totalorder %s13, 5
      %p167 = pnand %p165, %p166
      %p168 = pneg %p167
      // Predicated region
      $region33: #{tpu_custom_call.1} parent=5 // pred_check
        _
      $region34: #{tpu_custom_call.1} parent=5 // pred_check_branch
        %170 = sbr.rel (%p167) target = $region36
      $region35: #{tpu_custom_call.1} parent=5 // pred_region
        %s171 = ssub.s32 %s13, 1
        %s172 = smul.u32 4, %s18
        %p173 = scmp.lt.s32.totalorder %s172, 15
        %s174 = scalar_select %p173, %s172, 15
        %s175 = smul.addr %s174, 8
        %s176 = scalar_lea.vmem %s0, %s175
        %p177 = pneg %p39
        %p178 = pneg %p36
        %p179 = pneg %p60
        %p180 = pneg %p57
        %p181 = pneg %p81
        %p182 = pneg %p78
        %p183 = pneg %p102
        %p184 = pneg %p99
        %p185 = pneg %p128
        %p186 = pneg %p125
        %s187 = sand.u32 %s115, 1
        %s188 = scalar_lea.sflag [#allocation3], %s187
        %s189 = sand.u32 %s115, 1
        %s190 = smul.addr %s189, 32
        %s191 = scalar_lea.vmem [#allocation2], %s190
        %s192 = smul.u32 4, %s18
        %p193 = scmp.lt.s32.totalorder %s192, 15
        %s194 = scalar_select %p193, %s192, 15
        %s195 = smul.addr %s194, 8
        %s196 = scalar_lea.vmem %s0, %s195
        %s197 = smul.u32 4, %s18
        %s198 = smul.u32 4, %s18
        %v199 = vld [vmem:[%s196] sm:$0xff]
        %v200 = vld [vmem:[%s196 + $0x8] sm:$0xff]
        %v201 = vld [vmem:[%s196 + $0x10] sm:$0xff]
        %v202 = vld [vmem:[%s196 + $0x18] sm:$0xff]
        %v203 = vsub.f32 0.0, %v199
        %v204 = vsub.f32 0.0, %v200
        %v205 = vsub.f32 0.0, %v201
        %v206 = vsub.f32 0.0, %v202
        %v207 = vmul.f32 %v203, 1.442695
        %v208 = vpow.pop %v207
        %v209 = vmul.f32 %v204, 1.442695
        %v210 = vpow.pop %v209
        %v211 = vmul.f32 %v205, 1.442695
        %v212 = vpow.pop %v211
        %v213 = vmul.f32 %v206, 1.442695
        %v214 = vpow.pop %v213
        %v215 = vperm.slane %v208, 0
        %v216 = vlaneseq
        %v217 = vshrl.u32 %v216, 7
        %219 = vset.pattern.permute.xlu0 %v217
        %220 = vperm.xlu0 %219, %v215
        %v221 = vpop.permute.xlu0 %220
        %v222 = vperm.slane %v208, 1
        %v223 = vlaneseq
        %v224 = vshrl.u32 %v223, 7
        %226 = vset.pattern.permute.xlu0 %v224
        %227 = vperm.xlu0 %226, %v222
        %v228 = vpop.permute.xlu0 %227
        %v229 = vperm.slane %v208, 2
        %v230 = vlaneseq
        %v231 = vshrl.u32 %v230, 7
        %233 = vset.pattern.permute.xlu0 %v231
        %234 = vperm.xlu0 %233, %v229
        %v235 = vpop.permute.xlu0 %234
        %v236 = vperm.slane %v208, 3
        %v237 = vlaneseq
        %v238 = vshrl.u32 %v237, 7
        %240 = vset.pattern.permute.xlu0 %v238
        %241 = vperm.xlu0 %240, %v236
        %v242 = vpop.permute.xlu0 %241
        %v243 = vperm.slane %v208, 4
        %v244 = vlaneseq
        %v245 = vshrl.u32 %v244, 7
        %247 = vset.pattern.permute.xlu0 %v245
        %248 = vperm.xlu0 %247, %v243
        %v249 = vpop.permute.xlu0 %248
        %v250 = vperm.slane %v208, 5
        %v251 = vlaneseq
        %v252 = vshrl.u32 %v251, 7
        %254 = vset.pattern.permute.xlu0 %v252
        %255 = vperm.xlu0 %254, %v250
        %v256 = vpop.permute.xlu0 %255
        %v257 = vperm.slane %v208, 6
        %v258 = vlaneseq
        %v259 = vshrl.u32 %v258, 7
        %261 = vset.pattern.permute.xlu0 %v259
        %262 = vperm.xlu0 %261, %v257
        %v263 = vpop.permute.xlu0 %262
        %v264 = vperm.slane %v208, 7
        %v265 = vlaneseq
        %v266 = vshrl.u32 %v265, 7
        %268 = vset.pattern.permute.xlu0 %v266
        %269 = vperm.xlu0 %268, %v264
        %v270 = vpop.permute.xlu0 %269
        %v271 = vperm.slane %v210, 0
        %v272 = vlaneseq
        %v273 = vshrl.u32 %v272, 7
        %275 = vset.pattern.permute.xlu0 %v273
        %276 = vperm.xlu0 %275, %v271
        %v277 = vpop.permute.xlu0 %276
        %v278 = vperm.slane %v210, 1
        %v279 = vlaneseq
        %v280 = vshrl.u32 %v279, 7
        %282 = vset.pattern.permute.xlu0 %v280
        %283 = vperm.xlu0 %282, %v278
        %v284 = vpop.permute.xlu0 %283
        %v285 = vperm.slane %v210, 2
        %v286 = vlaneseq
        %v287 = vshrl.u32 %v286, 7
        %289 = vset.pattern.permute.xlu0 %v287
        %290 = vperm.xlu0 %289, %v285
        %v291 = vpop.permute.xlu0 %290
        %v292 = vperm.slane %v210, 3
        %v293 = vlaneseq
        %v294 = vshrl.u32 %v293, 7
        %296 = vset.pattern.permute.xlu0 %v294
        %297 = vperm.xlu0 %296, %v292
        %v298 = vpop.permute.xlu0 %297
        %v299 = vperm.slane %v210, 4
        %v300 = vlaneseq
        %v301 = vshrl.u32 %v300, 7
        %303 = vset.pattern.permute.xlu0 %v301
        %304 = vperm.xlu0 %303, %v299
        %v305 = vpop.permute.xlu0 %304
        %v306 = vperm.slane %v210, 5
        %v307 = vlaneseq
        %v308 = vshrl.u32 %v307, 7
        %310 = vset.pattern.permute.xlu0 %v308
        %311 = vperm.xlu0 %310, %v306
        %v312 = vpop.permute.xlu0 %311
        %v313 = vperm.slane %v210, 6
        %v314 = vlaneseq
        %v315 = vshrl.u32 %v314, 7
        %317 = vset.pattern.permute.xlu0 %v315
        %318 = vperm.xlu0 %317, %v313
        %v319 = vpop.permute.xlu0 %318
        %v320 = vperm.slane %v210, 7
        %v321 = vlaneseq
        %v322 = vshrl.u32 %v321, 7
        %324 = vset.pattern.permute.xlu0 %v322
        %325 = vperm.xlu0 %324, %v320
        %v326 = vpop.permute.xlu0 %325
        %v327 = vperm.slane %v212, 0
        %v328 = vlaneseq
        %v329 = vshrl.u32 %v328, 7
        %331 = vset.pattern.permute.xlu0 %v329
        %332 = vperm.xlu0 %331, %v327
        %v333 = vpop.permute.xlu0 %332
        %v334 = vperm.slane %v212, 1
        %v335 = vlaneseq
        %v336 = vshrl.u32 %v335, 7
        %338 = vset.pattern.permute.xlu0 %v336
        %339 = vperm.xlu0 %338, %v334
        %v340 = vpop.permute.xlu0 %339
        %v341 = vperm.slane %v212, 2
        %v342 = vlaneseq
        %v343 = vshrl.u32 %v342, 7
        %345 = vset.pattern.permute.xlu0 %v343
        %346 = vperm.xlu0 %345, %v341
        %v347 = vpop.permute.xlu0 %346
        %v348 = vperm.slane %v212, 3
        %v349 = vlaneseq
        %v350 = vshrl.u32 %v349, 7
        %352 = vset.pattern.permute.xlu0 %v350
        %353 = vperm.xlu0 %352, %v348
        %v354 = vpop.permute.xlu0 %353
        %v355 = vperm.slane %v212, 4
        %v356 = vlaneseq
        %v357 = vshrl.u32 %v356, 7
        %359 = vset.pattern.permute.xlu0 %v357
        %360 = vperm.xlu0 %359, %v355
        %v361 = vpop.permute.xlu0 %360
        %v362 = vperm.slane %v212, 5
        %v363 = vlaneseq
        %v364 = vshrl.u32 %v363, 7
        %366 = vset.pattern.permute.xlu0 %v364
        %367 = vperm.xlu0 %366, %v362
        %v368 = vpop.permute.xlu0 %367
        %v369 = vperm.slane %v212, 6
        %v370 = vlaneseq
        %v371 = vshrl.u32 %v370, 7
        %373 = vset.pattern.permute.xlu0 %v371
        %374 = vperm.xlu0 %373, %v369
        %v375 = vpop.permute.xlu0 %374
        %v376 = vperm.slane %v212, 7
        %v377 = vlaneseq
        %v378 = vshrl.u32 %v377, 7
        %380 = vset.pattern.permute.xlu0 %v378
        %381 = vperm.xlu0 %380, %v376
        %v382 = vpop.permute.xlu0 %381
        %v383 = vperm.slane %v214, 0
        %v384 = vlaneseq
        %v385 = vshrl.u32 %v384, 7
        %387 = vset.pattern.permute.xlu0 %v385
        %388 = vperm.xlu0 %387, %v383
        %v389 = vpop.permute.xlu0 %388
        %v390 = vperm.slane %v214, 1
        %v391 = vlaneseq
        %v392 = vshrl.u32 %v391, 7
        %394 = vset.pattern.permute.xlu0 %v392
        %395 = vperm.xlu0 %394, %v390
        %v396 = vpop.permute.xlu0 %395
        %v397 = vperm.slane %v214, 2
        %v398 = vlaneseq
        %v399 = vshrl.u32 %v398, 7
        %401 = vset.pattern.permute.xlu0 %v399
        %402 = vperm.xlu0 %401, %v397
        %v403 = vpop.permute.xlu0 %402
        %v404 = vperm.slane %v214, 3
        %v405 = vlaneseq
        %v406 = vshrl.u32 %v405, 7
        %408 = vset.pattern.permute.xlu0 %v406
        %409 = vperm.xlu0 %408, %v404
        %v410 = vpop.permute.xlu0 %409
        %v411 = vperm.slane %v214, 4
        %v412 = vlaneseq
        %v413 = vshrl.u32 %v412, 7
        %415 = vset.pattern.permute.xlu0 %v413
        %416 = vperm.xlu0 %415, %v411
        %v417 = vpop.permute.xlu0 %416
        %v418 = vperm.slane %v214, 5
        %v419 = vlaneseq
        %v420 = vshrl.u32 %v419, 7
        %422 = vset.pattern.permute.xlu0 %v420
        %423 = vperm.xlu0 %422, %v418
        %v424 = vpop.permute.xlu0 %423
        %v425 = vperm.slane %v214, 6
        %v426 = vlaneseq
        %v427 = vshrl.u32 %v426, 7
        %429 = vset.pattern.permute.xlu0 %v427
        %430 = vperm.xlu0 %429, %v425
        %v431 = vpop.permute.xlu0 %430
        %v432 = vperm.slane %v214, 7
        %v433 = vlaneseq
        %v434 = vshrl.u32 %v433, 7
        %436 = vset.pattern.permute.xlu0 %v434
        %437 = vperm.xlu0 %436, %v432
        %v438 = vpop.permute.xlu0 %437
        %v439 = vrot.slane %v235, 4
        %vm440 = vcmask 1047556
        %v441 = vsel %vm440, %v439, %v221
        %v442 = vrot.slane %v221, 4
        %v443 = vsel %vm440, %v235, %v442
        %v445 = vunpack.c.l.s4 1983009808
        %v446 = vunpack.c.0.s8 %v445
        %v447 = vperm.slane %v441, %v446
        %v449 = vunpack.c.l.s4 1983009808
        %v450 = vunpack.c.0.s8 %v449
        %v451 = vperm.slane %v443, %v450
        %v452 = vrot.slane %v242, 4
        %v453 = vsel %vm440, %v452, %v228
        %v454 = vrot.slane %v228, 4
        %v455 = vsel %vm440, %v242, %v454
        %v457 = vunpack.c.l.s4 1983009808
        %v458 = vunpack.c.0.s8 %v457
        %v459 = vperm.slane %v453, %v458
        %v461 = vunpack.c.l.s4 1983009808
        %v462 = vunpack.c.0.s8 %v461
        %v463 = vperm.slane %v455, %v462
        %v464 = vrot.slane %v263, 4
        %v465 = vsel %vm440, %v464, %v249
        %v466 = vrot.slane %v249, 4
        %v467 = vsel %vm440, %v263, %v466
        %v469 = vunpack.c.l.s4 1983009808
        %v470 = vunpack.c.0.s8 %v469
        %v471 = vperm.slane %v465, %v470
        %v473 = vunpack.c.l.s4 1983009808
        %v474 = vunpack.c.0.s8 %v473
        %v475 = vperm.slane %v467, %v474
        %v476 = vrot.slane %v270, 4
        %v477 = vsel %vm440, %v476, %v256
        %v478 = vrot.slane %v256, 4
        %v479 = vsel %vm440, %v270, %v478
        %v481 = vunpack.c.l.s4 1983009808
        %v482 = vunpack.c.0.s8 %v481
        %v483 = vperm.slane %v477, %v482
        %v485 = vunpack.c.l.s4 1983009808
        %v486 = vunpack.c.0.s8 %v485
        %v487 = vperm.slane %v479, %v486
        %v488 = vrot.slane %v459, 4
        %v489 = vsel %vm440, %v488, %v447
        %v490 = vrot.slane %v447, 4
        %v491 = vsel %vm440, %v459, %v490
        %v493 = vunpack.c.l.s4 1934713408
        %v494 = vunpack.c.0.s8 %v493
        %v495 = vperm.slane %v489, %v494
        %v497 = vunpack.c.l.s4 1934713408
        %v498 = vunpack.c.0.s8 %v497
        %v499 = vperm.slane %v491, %v498
        %v500 = vrot.slane %v463, 4
        %v501 = vsel %vm440, %v500, %v451
        %v502 = vrot.slane %v451, 4
        %v503 = vsel %vm440, %v463, %v502
        %v505 = vunpack.c.l.s4 1934713408
        %v506 = vunpack.c.0.s8 %v505
        %v507 = vperm.slane %v501, %v506
        %v509 = vunpack.c.l.s4 1934713408
        %v510 = vunpack.c.0.s8 %v509
        %v511 = vperm.slane %v503, %v510
        %v512 = vrot.slane %v483, 4
        %v513 = vsel %vm440, %v512, %v471
        %v514 = vrot.slane %v471, 4
        %v515 = vsel %vm440, %v483, %v514
        %v517 = vunpack.c.l.s4 1934713408
        %v518 = vunpack.c.0.s8 %v517
        %v519 = vperm.slane %v513, %v518
        %v521 = vunpack.c.l.s4 1934713408
        %v522 = vunpack.c.0.s8 %v521
        %v523 = vperm.slane %v515, %v522
        %v524 = vrot.slane %v487, 4
        %v525 = vsel %vm440, %v524, %v475
        %v526 = vrot.slane %v475, 4
        %v527 = vsel %vm440, %v487, %v526
        %v529 = vunpack.c.l.s4 1934713408
        %v530 = vunpack.c.0.s8 %v529
        %v531 = vperm.slane %v525, %v530
        %v533 = vunpack.c.l.s4 1934713408
        %v534 = vunpack.c.0.s8 %v533
        %v535 = vperm.slane %v527, %v534
        %v536 = vrot.slane %v519, 4
        %v537 = vsel %vm440, %v536, %v495
        %v538 = vrot.slane %v495, 4
        %v539 = vsel %vm440, %v519, %v538
        %v540 = vrot.slane %v523, 4
        %v541 = vsel %vm440, %v540, %v499
        %v542 = vrot.slane %v499, 4
        %v543 = vsel %vm440, %v523, %v542
        %v544 = vrot.slane %v531, 4
        %v545 = vsel %vm440, %v544, %v507
        %v546 = vrot.slane %v507, 4
        %v547 = vsel %vm440, %v531, %v546
        %v548 = vrot.slane %v535, 4
        %v549 = vsel %vm440, %v548, %v511
        %v550 = vrot.slane %v511, 4
        %v551 = vsel %vm440, %v535, %v550
        %v552 = vrot.slane %v291, 4
        %v553 = vsel %vm440, %v552, %v277
        %v554 = vrot.slane %v277, 4
        %v555 = vsel %vm440, %v291, %v554
        %v557 = vunpack.c.l.s4 1983009808
        %v558 = vunpack.c.0.s8 %v557
        %v559 = vperm.slane %v553, %v558
        %v561 = vunpack.c.l.s4 1983009808
        %v562 = vunpack.c.0.s8 %v561
        %v563 = vperm.slane %v555, %v562
        %v564 = vrot.slane %v298, 4
        %v565 = vsel %vm440, %v564, %v284
        %v566 = vrot.slane %v284, 4
        %v567 = vsel %vm440, %v298, %v566
        %v569 = vunpack.c.l.s4 1983009808
        %v570 = vunpack.c.0.s8 %v569
        %v571 = vperm.slane %v565, %v570
        %v573 = vunpack.c.l.s4 1983009808
        %v574 = vunpack.c.0.s8 %v573
        %v575 = vperm.slane %v567, %v574
        %v576 = vrot.slane %v319, 4
        %v577 = vsel %vm440, %v576, %v305
        %v578 = vrot.slane %v305, 4
        %v579 = vsel %vm440, %v319, %v578
        %v581 = vunpack.c.l.s4 1983009808
        %v582 = vunpack.c.0.s8 %v581
        %v583 = vperm.slane %v577, %v582
        %v585 = vunpack.c.l.s4 1983009808
        %v586 = vunpack.c.0.s8 %v585
        %v587 = vperm.slane %v579, %v586
        %v588 = vrot.slane %v326, 4
        %v589 = vsel %vm440, %v588, %v312
        %v590 = vrot.slane %v312, 4
        %v591 = vsel %vm440, %v326, %v590
        %v593 = vunpack.c.l.s4 1983009808
        %v594 = vunpack.c.0.s8 %v593
        %v595 = vperm.slane %v589, %v594
        %v597 = vunpack.c.l.s4 1983009808
        %v598 = vunpack.c.0.s8 %v597
        %v599 = vperm.slane %v591, %v598
        %v600 = vrot.slane %v571, 4
        %v601 = vsel %vm440, %v600, %v559
        %v602 = vrot.slane %v559, 4
        %v603 = vsel %vm440, %v571, %v602
        %v605 = vunpack.c.l.s4 1934713408
        %v606 = vunpack.c.0.s8 %v605
        %v607 = vperm.slane %v601, %v606
        %v609 = vunpack.c.l.s4 1934713408
        %v610 = vunpack.c.0.s8 %v609
        %v611 = vperm.slane %v603, %v610
        %v612 = vrot.slane %v575, 4
        %v613 = vsel %vm440, %v612, %v563
        %v614 = vrot.slane %v563, 4
        %v615 = vsel %vm440, %v575, %v614
        %v617 = vunpack.c.l.s4 1934713408
        %v618 = vunpack.c.0.s8 %v617
        %v619 = vperm.slane %v613, %v618
        %v621 = vunpack.c.l.s4 1934713408
        %v622 = vunpack.c.0.s8 %v621
        %v623 = vperm.slane %v615, %v622
        %v624 = vrot.slane %v595, 4
        %v625 = vsel %vm440, %v624, %v583
        %v626 = vrot.slane %v583, 4
        %v627 = vsel %vm440, %v595, %v626
        %v629 = vunpack.c.l.s4 1934713408
        %v630 = vunpack.c.0.s8 %v629
        %v631 = vperm.slane %v625, %v630
        %v633 = vunpack.c.l.s4 1934713408
        %v634 = vunpack.c.0.s8 %v633
        %v635 = vperm.slane %v627, %v634
        %v636 = vrot.slane %v599, 4
        %v637 = vsel %vm440, %v636, %v587
        %v638 = vrot.slane %v587, 4
        %v639 = vsel %vm440, %v599, %v638
        %v641 = vunpack.c.l.s4 1934713408
        %v642 = vunpack.c.0.s8 %v641
        %v643 = vperm.slane %v637, %v642
        %v645 = vunpack.c.l.s4 1934713408
        %v646 = vunpack.c.0.s8 %v645
        %v647 = vperm.slane %v639, %v646
        %v648 = vrot.slane %v631, 4
        %v649 = vsel %vm440, %v648, %v607
        %v650 = vrot.slane %v607, 4
        %v651 = vsel %vm440, %v631, %v650
        %v652 = vrot.slane %v635, 4
        %v653 = vsel %vm440, %v652, %v611
        %v654 = vrot.slane %v611, 4
        %v655 = vsel %vm440, %v635, %v654
        %v656 = vrot.slane %v643, 4
        %v657 = vsel %vm440, %v656, %v619
        %v658 = vrot.slane %v619, 4
        %v659 = vsel %vm440, %v643, %v658
        %v660 = vrot.slane %v647, 4
        %v661 = vsel %vm440, %v660, %v623
        %v662 = vrot.slane %v623, 4
        %v663 = vsel %vm440, %v647, %v662
        %v664 = vrot.slane %v347, 4
        %v665 = vsel %vm440, %v664, %v333
        %v666 = vrot.slane %v333, 4
        %v667 = vsel %vm440, %v347, %v666
        %v669 = vunpack.c.l.s4 1983009808
        %v670 = vunpack.c.0.s8 %v669
        %v671 = vperm.slane %v665, %v670
        %v673 = vunpack.c.l.s4 1983009808
        %v674 = vunpack.c.0.s8 %v673
        %v675 = vperm.slane %v667, %v674
        %v676 = vrot.slane %v354, 4
        %v677 = vsel %vm440, %v676, %v340
        %v678 = vrot.slane %v340, 4
        %v679 = vsel %vm440, %v354, %v678
        %v681 = vunpack.c.l.s4 1983009808
        %v682 = vunpack.c.0.s8 %v681
        %v683 = vperm.slane %v677, %v682
        %v685 = vunpack.c.l.s4 1983009808
        %v686 = vunpack.c.0.s8 %v685
        %v687 = vperm.slane %v679, %v686
        %v688 = vrot.slane %v375, 4
        %v689 = vsel %vm440, %v688, %v361
        %v690 = vrot.slane %v361, 4
        %v691 = vsel %vm440, %v375, %v690
        %v693 = vunpack.c.l.s4 1983009808
        %v694 = vunpack.c.0.s8 %v693
        %v695 = vperm.slane %v689, %v694
        %v697 = vunpack.c.l.s4 1983009808
        %v698 = vunpack.c.0.s8 %v697
        %v699 = vperm.slane %v691, %v698
        %v700 = vrot.slane %v382, 4
        %v701 = vsel %vm440, %v700, %v368
        %v702 = vrot.slane %v368, 4
        %v703 = vsel %vm440, %v382, %v702
        %v705 = vunpack.c.l.s4 1983009808
        %v706 = vunpack.c.0.s8 %v705
        %v707 = vperm.slane %v701, %v706
        %v709 = vunpack.c.l.s4 1983009808
        %v710 = vunpack.c.0.s8 %v709
        %v711 = vperm.slane %v703, %v710
        %v712 = vrot.slane %v683, 4
        %v713 = vsel %vm440, %v712, %v671
        %v714 = vrot.slane %v671, 4
        %v715 = vsel %vm440, %v683, %v714
        %v717 = vunpack.c.l.s4 1934713408
        %v718 = vunpack.c.0.s8 %v717
        %v719 = vperm.slane %v713, %v718
        %v721 = vunpack.c.l.s4 1934713408
        %v722 = vunpack.c.0.s8 %v721
        %v723 = vperm.slane %v715, %v722
        %v724 = vrot.slane %v687, 4
        %v725 = vsel %vm440, %v724, %v675
        %v726 = vrot.slane %v675, 4
        %v727 = vsel %vm440, %v687, %v726
        %v729 = vunpack.c.l.s4 1934713408
        %v730 = vunpack.c.0.s8 %v729
        %v731 = vperm.slane %v725, %v730
        %v733 = vunpack.c.l.s4 1934713408
        %v734 = vunpack.c.0.s8 %v733
        %v735 = vperm.slane %v727, %v734
        %v736 = vrot.slane %v707, 4
        %v737 = vsel %vm440, %v736, %v695
        %v738 = vrot.slane %v695, 4
        %v739 = vsel %vm440, %v707, %v738
        %v741 = vunpack.c.l.s4 1934713408
        %v742 = vunpack.c.0.s8 %v741
        %v743 = vperm.slane %v737, %v742
        %v745 = vunpack.c.l.s4 1934713408
        %v746 = vunpack.c.0.s8 %v745
        %v747 = vperm.slane %v739, %v746
        %v748 = vrot.slane %v711, 4
        %v749 = vsel %vm440, %v748, %v699
        %v750 = vrot.slane %v699, 4
        %v751 = vsel %vm440, %v711, %v750
        %v753 = vunpack.c.l.s4 1934713408
        %v754 = vunpack.c.0.s8 %v753
        %v755 = vperm.slane %v749, %v754
        %v757 = vunpack.c.l.s4 1934713408
        %v758 = vunpack.c.0.s8 %v757
        %v759 = vperm.slane %v751, %v758
        %v760 = vrot.slane %v743, 4
        %v761 = vsel %vm440, %v760, %v719
        %v762 = vrot.slane %v719, 4
        %v763 = vsel %vm440, %v743, %v762
        %v764 = vrot.slane %v747, 4
        %v765 = vsel %vm440, %v764, %v723
        %v766 = vrot.slane %v723, 4
        %v767 = vsel %vm440, %v747, %v766
        %v768 = vrot.slane %v755, 4
        %v769 = vsel %vm440, %v768, %v731
        %v770 = vrot.slane %v731, 4
        %v771 = vsel %vm440, %v755, %v770
        %v772 = vrot.slane %v759, 4
        %v773 = vsel %vm440, %v772, %v735
        %v774 = vrot.slane %v735, 4
        %v775 = vsel %vm440, %v759, %v774
        %v776 = vrot.slane %v403, 4
        %v777 = vsel %vm440, %v776, %v389
        %v778 = vrot.slane %v389, 4
        %v779 = vsel %vm440, %v403, %v778
        %v781 = vunpack.c.l.s4 1983009808
        %v782 = vunpack.c.0.s8 %v781
        %v783 = vperm.slane %v777, %v782
        %v785 = vunpack.c.l.s4 1983009808
        %v786 = vunpack.c.0.s8 %v785
        %v787 = vperm.slane %v779, %v786
        %v788 = vrot.slane %v410, 4
        %v789 = vsel %vm440, %v788, %v396
        %v790 = vrot.slane %v396, 4
        %v791 = vsel %vm440, %v410, %v790
        %v793 = vunpack.c.l.s4 1983009808
        %v794 = vunpack.c.0.s8 %v793
        %v795 = vperm.slane %v789, %v794
        %v797 = vunpack.c.l.s4 1983009808
        %v798 = vunpack.c.0.s8 %v797
        %v799 = vperm.slane %v791, %v798
        %v800 = vrot.slane %v431, 4
        %v801 = vsel %vm440, %v800, %v417
        %v802 = vrot.slane %v417, 4
        %v803 = vsel %vm440, %v431, %v802
        %v805 = vunpack.c.l.s4 1983009808
        %v806 = vunpack.c.0.s8 %v805
        %v807 = vperm.slane %v801, %v806
        %v809 = vunpack.c.l.s4 1983009808
        %v810 = vunpack.c.0.s8 %v809
        %v811 = vperm.slane %v803, %v810
        %v812 = vrot.slane %v438, 4
        %v813 = vsel %vm440, %v812, %v424
        %v814 = vrot.slane %v424, 4
        %v815 = vsel %vm440, %v438, %v814
        %v817 = vunpack.c.l.s4 1983009808
        %v818 = vunpack.c.0.s8 %v817
        %v819 = vperm.slane %v813, %v818
        %v821 = vunpack.c.l.s4 1983009808
        %v822 = vunpack.c.0.s8 %v821
        %v823 = vperm.slane %v815, %v822
        %v824 = vrot.slane %v795, 4
        %v825 = vsel %vm440, %v824, %v783
        %v826 = vrot.slane %v783, 4
        %v827 = vsel %vm440, %v795, %v826
        %v829 = vunpack.c.l.s4 1934713408
        %v830 = vunpack.c.0.s8 %v829
        %v831 = vperm.slane %v825, %v830
        %v833 = vunpack.c.l.s4 1934713408
        %v834 = vunpack.c.0.s8 %v833
        %v835 = vperm.slane %v827, %v834
        %v836 = vrot.slane %v799, 4
        %v837 = vsel %vm440, %v836, %v787
        %v838 = vrot.slane %v787, 4
        %v839 = vsel %vm440, %v799, %v838
        %v841 = vunpack.c.l.s4 1934713408
        %v842 = vunpack.c.0.s8 %v841
        %v843 = vperm.slane %v837, %v842
        %v845 = vunpack.c.l.s4 1934713408
        %v846 = vunpack.c.0.s8 %v845
        %v847 = vperm.slane %v839, %v846
        %v848 = vrot.slane %v819, 4
        %v849 = vsel %vm440, %v848, %v807
        %v850 = vrot.slane %v807, 4
        %v851 = vsel %vm440, %v819, %v850
        %v853 = vunpack.c.l.s4 1934713408
        %v854 = vunpack.c.0.s8 %v853
        %v855 = vperm.slane %v849, %v854
        %v857 = vunpack.c.l.s4 1934713408
        %v858 = vunpack.c.0.s8 %v857
        %v859 = vperm.slane %v851, %v858
        %v860 = vrot.slane %v823, 4
        %v861 = vsel %vm440, %v860, %v811
        %v862 = vrot.slane %v811, 4
        %v863 = vsel %vm440, %v823, %v862
        %v865 = vunpack.c.l.s4 1934713408
        %v866 = vunpack.c.0.s8 %v865
        %v867 = vperm.slane %v861, %v866
        %v869 = vunpack.c.l.s4 1934713408
        %v870 = vunpack.c.0.s8 %v869
        %v871 = vperm.slane %v863, %v870
        %v872 = vrot.slane %v855, 4
        %v873 = vsel %vm440, %v872, %v831
        %v874 = vrot.slane %v831, 4
        %v875 = vsel %vm440, %v855, %v874
        %v876 = vrot.slane %v859, 4
        %v877 = vsel %vm440, %v876, %v835
        %v878 = vrot.slane %v835, 4
        %v879 = vsel %vm440, %v859, %v878
        %v880 = vrot.slane %v867, 4
        %v881 = vsel %vm440, %v880, %v843
        %v882 = vrot.slane %v843, 4
        %v883 = vsel %vm440, %v867, %v882
        %v884 = vrot.slane %v871, 4
        %v885 = vsel %vm440, %v884, %v847
        %v886 = vrot.slane %v847, 4
        %v887 = vsel %vm440, %v871, %v886
        %892 = vrot.lane.b32.xlu0 %v539, 16
        %v893 = vpop.permute.xlu0 %892
        %894 = vrot.lane.b32.xlu0 %v651, 16
        %v895 = vpop.permute.xlu0 %894
        %896 = vrot.lane.b32.xlu0 %v763, 16
        %v897 = vpop.permute.xlu0 %896
        %898 = vrot.lane.b32.xlu0 %v875, 16
        %v899 = vpop.permute.xlu0 %898
        %908 = vrot.lane.b32.xlu0 %v541, 32
        %v909 = vpop.permute.xlu0 %908
        %910 = vrot.lane.b32.xlu0 %v653, 32
        %v911 = vpop.permute.xlu0 %910
        %912 = vrot.lane.b32.xlu0 %v765, 32
        %v913 = vpop.permute.xlu0 %912
        %914 = vrot.lane.b32.xlu0 %v877, 32
        %v915 = vpop.permute.xlu0 %914
        %924 = vrot.lane.b32.xlu0 %v543, 48
        %v925 = vpop.permute.xlu0 %924
        %926 = vrot.lane.b32.xlu0 %v655, 48
        %v927 = vpop.permute.xlu0 %926
        %928 = vrot.lane.b32.xlu0 %v767, 48
        %v929 = vpop.permute.xlu0 %928
        %930 = vrot.lane.b32.xlu0 %v879, 48
        %v931 = vpop.permute.xlu0 %930
        %940 = vrot.lane.b32.xlu0 %v545, 64
        %v941 = vpop.permute.xlu0 %940
        %942 = vrot.lane.b32.xlu0 %v657, 64
        %v943 = vpop.permute.xlu0 %942
        %944 = vrot.lane.b32.xlu0 %v769, 64
        %v945 = vpop.permute.xlu0 %944
        %946 = vrot.lane.b32.xlu0 %v881, 64
        %v947 = vpop.permute.xlu0 %946
        %956 = vrot.lane.b32.xlu0 %v547, 80
        %v957 = vpop.permute.xlu0 %956
        %958 = vrot.lane.b32.xlu0 %v659, 80
        %v959 = vpop.permute.xlu0 %958
        %960 = vrot.lane.b32.xlu0 %v771, 80
        %v961 = vpop.permute.xlu0 %960
        %962 = vrot.lane.b32.xlu0 %v883, 80
        %v963 = vpop.permute.xlu0 %962
        %972 = vrot.lane.b32.xlu0 %v549, 96
        %v973 = vpop.permute.xlu0 %972
        %974 = vrot.lane.b32.xlu0 %v661, 96
        %v975 = vpop.permute.xlu0 %974
        %976 = vrot.lane.b32.xlu0 %v773, 96
        %v977 = vpop.permute.xlu0 %976
        %978 = vrot.lane.b32.xlu0 %v885, 96
        %v979 = vpop.permute.xlu0 %978
        %988 = vrot.lane.b32.xlu0 %v551, 112
        %v989 = vpop.permute.xlu0 %988
        %990 = vrot.lane.b32.xlu0 %v663, 112
        %v991 = vpop.permute.xlu0 %990
        %992 = vrot.lane.b32.xlu0 %v775, 112
        %v993 = vpop.permute.xlu0 %992
        %994 = vrot.lane.b32.xlu0 %v887, 112
        %v995 = vpop.permute.xlu0 %994
        %vm1000 = vcmask 130048
        %v1001 = vsel %vm1000, %v537, %v893
        %v1002 = vsel %vm1000, %v649, %v895
        %v1003 = vsel %vm1000, %v761, %v897
        %v1004 = vsel %vm1000, %v873, %v899
        %vm1005 = vcmask 261120
        %v1006 = vsel %vm1005, %v1001, %v909
        %v1007 = vsel %vm1005, %v1002, %v911
        %v1008 = vsel %vm1005, %v1003, %v913
        %v1009 = vsel %vm1005, %v1004, %v915
        %vm1010 = vcmask 392192
        %v1011 = vsel %vm1010, %v1006, %v925
        %v1012 = vsel %vm1010, %v1007, %v927
        %v1013 = vsel %vm1010, %v1008, %v929
        %v1014 = vsel %vm1010, %v1009, %v931
        %vm1015 = vcmask 523264
        %v1016 = vsel %vm1015, %v1011, %v941
        %v1017 = vsel %vm1015, %v1012, %v943
        %v1018 = vsel %vm1015, %v1013, %v945
        %v1019 = vsel %vm1015, %v1014, %v947
        %vm1020 = vcmask 654336
        %v1021 = vsel %vm1020, %v1016, %v957
        %v1022 = vsel %vm1020, %v1017, %v959
        %v1023 = vsel %vm1020, %v1018, %v961
        %v1024 = vsel %vm1020, %v1019, %v963
        %vm1025 = vcmask 785408
        %v1026 = vsel %vm1025, %v1021, %v973
        %v1027 = vsel %vm1025, %v1022, %v975
        %v1028 = vsel %vm1025, %v1023, %v977
        %v1029 = vsel %vm1025, %v1024, %v979
        %vm1030 = vcmask 916480
        %v1031 = vsel %vm1030, %v1026, %v989
        %v1032 = vsel %vm1030, %v1027, %v991
        %v1033 = vsel %vm1030, %v1028, %v993
        %v1034 = vsel %vm1030, %v1029, %v995
        %v1035 = vld [vmem:[%s1] sm:$0x1]
        %v1037 = vperm.slane %v1035, 0
        %v1039 = vmul.f32 %v1031, %v1037
        %v1040 = vmul.f32 %v1032, %v1037
        %v1041 = vmul.f32 %v1033, %v1037
        %v1042 = vmul.f32 %v1034, %v1037
        %v1043 = vld [vmem:[%s2] sm:$0x1]
        %v1045 = vperm.slane %v1043, 0
        %v1047 = vadd.f32 %v1039, %v1045
        %v1048 = vadd.f32 %v1040, %v1045
        %v1049 = vadd.f32 %v1041, %v1045
        %v1050 = vadd.f32 %v1042, %v1045
        %v1051 = vand.u32 2147483647, %v1047
        %vm1052 = vcmp.le.f32.partialorder %v1051, 0.7853982
        %vm1053 = vcmp.lt.s32.totalorder %v1047, 0
        %v1054 = vand.u32 %v1047, 2139095040
        %v1055 = vshrl.u32 %v1054, 23
        %v1056 = vsub.s32 %v1055, 127
        %v1057 = vand.u32 2147483647, %v1047
        %v1058 = vand.u32 %v1057, 8388607
        %v1059 = vor.u32 %v1058, 8388608
        %v1060 = vsub.s32 0, %v1059
        %v1061 = vadd.s32 %v1056, 1
        %vm1062 = vcmp.gt.s32.totalorder %v1061, 0
        %v1063 = vsel %vm1062, %v1061, 0
        %v1064 = vshrl.u32 %v1063, 5
        %v1065 = vand.u32 %v1063, 31
        %v1066 = vsub.s32 32, %v1065
        %v1067 = vshrl.u32 683565275, %v1066
        %v1068 = vshll.u32 683565275, %v1065
        %v1069 = vshrl.u32 2475754826, %v1066
        %v1070 = vor.u32 %v1068, %v1069
        %v1071 = vshll.u32 2475754826, %v1065
        %v1072 = vshrl.u32 2131351028, %v1066
        %v1073 = vor.u32 %v1071, %v1072
        %v1074 = vshll.u32 2131351028, %v1065
        %v1075 = vshrl.u32 2102212464, %v1066
        %v1076 = vor.u32 %v1074, %v1075
        %v1077 = vshll.u32 2102212464, %v1065
        %v1078 = vshrl.u32 920167782, %v1066
        %v1079 = vor.u32 %v1077, %v1078
        %v1080 = vshll.u32 920167782, %v1065
        %v1081 = vshrl.u32 1326507024, %v1066
        %v1082 = vor.u32 %v1080, %v1081
        %vm1083 = vcmp.lt.s32.totalorder %v1064, 1
        %vm1084 = vcmp.lt.s32.totalorder %v1064, 2
        %vm1085 = vcmp.lt.s32.totalorder %v1064, 3
        %vm1086 = vcmp.lt.s32.totalorder %v1064, 4
        %v1087 = vsel %vm1083, %v1067, %v1070
        %v1088 = vsel %vm1086, %v1076, 2102212464
        %v1089 = vsel %vm1085, %v1073, %v1088
        %v1090 = vsel %vm1084, %v1087, %v1089
        %v1091 = vsel %vm1083, %v1070, %v1073
        %v1092 = vsel %vm1086, %v1079, 920167782
        %v1093 = vsel %vm1085, %v1076, %v1092
        %v1094 = vsel %vm1084, %v1091, %v1093
        %v1095 = vsel %vm1083, %v1073, %v1076
        %v1096 = vsel %vm1086, %v1082, 1326507024
        %v1097 = vsel %vm1085, %v1079, %v1096
        %v1098 = vsel %vm1084, %v1095, %v1097
        %v1099 = vshll.u32 %v1059, 8
        %v1100 = vand.u32 %v1099, 65535
        %v1101 = vshrl.u32 %v1099, 16
        %v1102 = vand.u32 %v1098, 65535
        %v1103 = vshrl.u32 %v1098, 16
        %v1104 = vmul.u32 %v1100, %v1102
        %v1105 = vmul.u32 %v1100, %v1103
        %v1106 = vmul.u32 %v1101, %v1102
        %v1107 = vmul.u32 %v1101, %v1103
        %v1108 = vshll.u32 %v1105, 16
        %v1109 = vshrl.u32 %v1105, 16
        %v1110 = vshll.u32 %v1106, 16
        %v1111 = vshrl.u32 %v1106, 16
        %vm1112 = vc.u32 %v1104, %v1108
        %v1113 = vsel %vm1112, 1, 0
        %v1114 = vadd.s32 %v1104, %v1108
        %v1115 = vadd.s32 %v1107, %v1113
        %vm1116 = vc.u32 %v1114, %v1110
        %v1117 = vsel %vm1116, 1, 0
        %v1118 = vadd.s32 %v1114, %v1110
        %v1119 = vadd.s32 %v1115, %v1117
        %v1120 = vadd.s32 %v1119, %v1109
        %v1121 = vadd.s32 %v1120, %v1111
        %v1122 = vand.u32 %v1099, 65535
        %v1123 = vshrl.u32 %v1099, 16
        %v1124 = vand.u32 %v1094, 65535
        %v1125 = vshrl.u32 %v1094, 16
        %v1126 = vmul.u32 %v1122, %v1124
        %v1127 = vmul.u32 %v1122, %v1125
        %v1128 = vmul.u32 %v1123, %v1124
        %v1129 = vmul.u32 %v1123, %v1125
        %v1130 = vshll.u32 %v1127, 16
        %v1131 = vshrl.u32 %v1127, 16
        %v1132 = vshll.u32 %v1128, 16
        %v1133 = vshrl.u32 %v1128, 16
        %vm1134 = vc.u32 %v1126, %v1130
        %v1135 = vsel %vm1134, 1, 0
        %v1136 = vadd.s32 %v1126, %v1130
        %v1137 = vadd.s32 %v1129, %v1135
        %vm1138 = vc.u32 %v1136, %v1132
        %v1139 = vsel %vm1138, 1, 0
        %v1140 = vadd.s32 %v1136, %v1132
        %v1141 = vadd.s32 %v1137, %v1139
        %v1142 = vadd.s32 %v1141, %v1131
        %v1143 = vadd.s32 %v1142, %v1133
        %v1144 = vmul.u32 %v1099, %v1090
        %v1145 = vadd.s32 %v1121, %v1140
        %vm1146 = vc.u32 %v1121, %v1140
        %v1147 = vadd.s32 %v1143, 1
        %v1148 = vsel %vm1146, %v1147, %v1143
        %v1149 = vadd.s32 %v1144, %v1148
        %v1150 = vadd.s32 %v1149, 536870912
        %v1151 = vshrl.u32 %v1150, 30
        %v1152 = vshll.u32 %v1151, 30
        %v1153 = vsub.s32 %v1149, %v1152
        %vm1154 = vcmp.lt.s32.totalorder %v1153, 0
        %v1155 = vsub.s32 0, %v1153
        %v1156 = vsel %vm1154, %v1155, %v1153
        %v1157 = vclz %v1156
        %v1158 = vsub.s32 %v1157, 2
        %vm1159 = vcmp.gt.s32.totalorder 0, %v1158
        %v1160 = vsel %vm1159, 0, %v1158
        %v1161 = vsub.s32 32, %v1160
        %v1162 = vshll.u32 %v1153, %v1160
        %v1163 = vshrl.u32 %v1145, %v1161
        %v1164 = vor.u32 %v1162, %v1163
        %v1165 = vsub.s32 4294967266, %v1160
        %v1166 = vadd.s32 %v1165, 127
        %v1167 = vshll.u32 %v1166, 23
        %v1168 = vor.u32 4788187, %v1167
        %v1169 = vand.u32 2147483647, %v1168
        %v1171 = vcvt.s32.f32 %v1164
        %v1172 = vmul.f32 %v1171, %v1169
        %v1173 = vxor.u32 %v1172, 2147483648
        %v1174 = vsel %vm1053, %v1173, %v1172
        %v1175 = vsub.s32 4, %v1151
        %v1176 = vsel %vm1053, %v1175, %v1151
        %v1177 = vsel %vm1052, %v1047, %v1174
        %v1178 = vsel %vm1052, 0, %v1176
        %v1179 = vmul.f32 %v1177, %v1177
        %v1180 = vmul.f32 %v1179, -0.001358992
        %v1181 = vadd.f32 %v1180, 0.041655596
        %v1182 = vmul.f32 %v1179, %v1181
        %v1183 = vadd.f32 %v1182, -0.4999988
        %v1184 = vmul.f32 %v1179, %v1183
        %v1185 = vadd.f32 1.0, %v1184
        %v1186 = vmul.f32 %v1177, %v1177
        %v1187 = vmul.f32 %v1186, -0.00019511016
        %v1188 = vadd.f32 %v1187, 0.008332121
        %v1189 = vmul.f32 %v1186, %v1188
        %v1190 = vadd.f32 %v1189, -0.16666654
        %v1191 = vmul.f32 %v1186, %v1190
        %v1192 = vadd.f32 %v1191, 1.0
        %v1193 = vmul.f32 %v1192, %v1177
        %vm1194 = vweird.f32 %v1047
        %v1195 = vadd.s32 %v1178, 3
        %v1196 = vand.u32 %v1195, 3
        %vm1197 = vcmp.lt.s32.totalorder %v1196, 2
        %vm1198 = vcmp.eq.s32.totalorder %v1196, 0
        %v1199 = vxor.u32 %v1193, 2147483648
        %v1200 = vsel %vm1198, %v1185, %v1199
        %vm1201 = vcmp.eq.s32.totalorder %v1196, 2
        %v1202 = vxor.u32 %v1185, 2147483648
        %v1203 = vsel %vm1201, %v1202, %v1193
        %v1204 = vsel %vm1197, %v1200, %v1203
        %v1205 = vsel %vm1194, nan, %v1204
        %v1206 = vand.u32 2147483647, %v1048
        %vm1207 = vcmp.le.f32.partialorder %v1206, 0.7853982
        %vm1208 = vcmp.lt.s32.totalorder %v1048, 0
        %v1209 = vand.u32 %v1048, 2139095040
        %v1210 = vshrl.u32 %v1209, 23
        %v1211 = vsub.s32 %v1210, 127
        %v1212 = vand.u32 2147483647, %v1048
        %v1213 = vand.u32 %v1212, 8388607
        %v1214 = vor.u32 %v1213, 8388608
        %v1215 = vsub.s32 0, %v1214
        %v1216 = vadd.s32 %v1211, 1
        %vm1217 = vcmp.gt.s32.totalorder %v1216, 0
        %v1218 = vsel %vm1217, %v1216, 0
        %v1219 = vshrl.u32 %v1218, 5
        %v1220 = vand.u32 %v1218, 31
        %v1221 = vsub.s32 32, %v1220
        %v1222 = vshrl.u32 683565275, %v1221
        %v1223 = vshll.u32 683565275, %v1220
        %v1224 = vshrl.u32 2475754826, %v1221
        %v1225 = vor.u32 %v1223, %v1224
        %v1226 = vshll.u32 2475754826, %v1220
        %v1227 = vshrl.u32 2131351028, %v1221
        %v1228 = vor.u32 %v1226, %v1227
        %v1229 = vshll.u32 2131351028, %v1220
        %v1230 = vshrl.u32 2102212464, %v1221
        %v1231 = vor.u32 %v1229, %v1230
        %v1232 = vshll.u32 2102212464, %v1220
        %v1233 = vshrl.u32 920167782, %v1221
        %v1234 = vor.u32 %v1232, %v1233
        %v1235 = vshll.u32 920167782, %v1220
        %v1236 = vshrl.u32 1326507024, %v1221
        %v1237 = vor.u32 %v1235, %v1236
        %vm1238 = vcmp.lt.s32.totalorder %v1219, 1
        %vm1239 = vcmp.lt.s32.totalorder %v1219, 2
        %vm1240 = vcmp.lt.s32.totalorder %v1219, 3
        %vm1241 = vcmp.lt.s32.totalorder %v1219, 4
        %v1242 = vsel %vm1238, %v1222, %v1225
        %v1243 = vsel %vm1241, %v1231, 2102212464
        %v1244 = vsel %vm1240, %v1228, %v1243
        %v1245 = vsel %vm1239, %v1242, %v1244
        %v1246 = vsel %vm1238, %v1225, %v1228
        %v1247 = vsel %vm1241, %v1234, 920167782
        %v1248 = vsel %vm1240, %v1231, %v1247
        %v1249 = vsel %vm1239, %v1246, %v1248
        %v1250 = vsel %vm1238, %v1228, %v1231
        %v1251 = vsel %vm1241, %v1237, 1326507024
        %v1252 = vsel %vm1240, %v1234, %v1251
        %v1253 = vsel %vm1239, %v1250, %v1252
        %v1254 = vshll.u32 %v1214, 8
        %v1255 = vand.u32 %v1254, 65535
        %v1256 = vshrl.u32 %v1254, 16
        %v1257 = vand.u32 %v1253, 65535
        %v1258 = vshrl.u32 %v1253, 16
        %v1259 = vmul.u32 %v1255, %v1257
        %v1260 = vmul.u32 %v1255, %v1258
        %v1261 = vmul.u32 %v1256, %v1257
        %v1262 = vmul.u32 %v1256, %v1258
        %v1263 = vshll.u32 %v1260, 16
        %v1264 = vshrl.u32 %v1260, 16
        %v1265 = vshll.u32 %v1261, 16
        %v1266 = vshrl.u32 %v1261, 16
        %vm1267 = vc.u32 %v1259, %v1263
        %v1268 = vsel %vm1267, 1, 0
        %v1269 = vadd.s32 %v1259, %v1263
        %v1270 = vadd.s32 %v1262, %v1268
        %vm1271 = vc.u32 %v1269, %v1265
        %v1272 = vsel %vm1271, 1, 0
        %v1273 = vadd.s32 %v1269, %v1265
        %v1274 = vadd.s32 %v1270, %v1272
        %v1275 = vadd.s32 %v1274, %v1264
        %v1276 = vadd.s32 %v1275, %v1266
        %v1277 = vand.u32 %v1254, 65535
        %v1278 = vshrl.u32 %v1254, 16
        %v1279 = vand.u32 %v1249, 65535
        %v1280 = vshrl.u32 %v1249, 16
        %v1281 = vmul.u32 %v1277, %v1279
        %v1282 = vmul.u32 %v1277, %v1280
        %v1283 = vmul.u32 %v1278, %v1279
        %v1284 = vmul.u32 %v1278, %v1280
        %v1285 = vshll.u32 %v1282, 16
        %v1286 = vshrl.u32 %v1282, 16
        %v1287 = vshll.u32 %v1283, 16
        %v1288 = vshrl.u32 %v1283, 16
        %vm1289 = vc.u32 %v1281, %v1285
        %v1290 = vsel %vm1289, 1, 0
        %v1291 = vadd.s32 %v1281, %v1285
        %v1292 = vadd.s32 %v1284, %v1290
        %vm1293 = vc.u32 %v1291, %v1287
        %v1294 = vsel %vm1293, 1, 0
        %v1295 = vadd.s32 %v1291, %v1287
        %v1296 = vadd.s32 %v1292, %v1294
        %v1297 = vadd.s32 %v1296, %v1286
        %v1298 = vadd.s32 %v1297, %v1288
        %v1299 = vmul.u32 %v1254, %v1245
        %v1300 = vadd.s32 %v1276, %v1295
        %vm1301 = vc.u32 %v1276, %v1295
        %v1302 = vadd.s32 %v1298, 1
        %v1303 = vsel %vm1301, %v1302, %v1298
        %v1304 = vadd.s32 %v1299, %v1303
        %v1305 = vadd.s32 %v1304, 536870912
        %v1306 = vshrl.u32 %v1305, 30
        %v1307 = vshll.u32 %v1306, 30
        %v1308 = vsub.s32 %v1304, %v1307
        %vm1309 = vcmp.lt.s32.totalorder %v1308, 0
        %v1310 = vsub.s32 0, %v1308
        %v1311 = vsel %vm1309, %v1310, %v1308
        %v1312 = vclz %v1311
        %v1313 = vsub.s32 %v1312, 2
        %vm1314 = vcmp.gt.s32.totalorder 0, %v1313
        %v1315 = vsel %vm1314, 0, %v1313
        %v1316 = vsub.s32 32, %v1315
        %v1317 = vshll.u32 %v1308, %v1315
        %v1318 = vshrl.u32 %v1300, %v1316
        %v1319 = vor.u32 %v1317, %v1318
        %v1320 = vsub.s32 4294967266, %v1315
        %v1321 = vadd.s32 %v1320, 127
        %v1322 = vshll.u32 %v1321, 23
        %v1323 = vor.u32 4788187, %v1322
        %v1324 = vand.u32 2147483647, %v1323
        %v1326 = vcvt.s32.f32 %v1319
        %v1327 = vmul.f32 %v1326, %v1324
        %v1328 = vxor.u32 %v1327, 2147483648
        %v1329 = vsel %vm1208, %v1328, %v1327
        %v1330 = vsub.s32 4, %v1306
        %v1331 = vsel %vm1208, %v1330, %v1306
        %v1332 = vsel %vm1207, %v1048, %v1329
        %v1333 = vsel %vm1207, 0, %v1331
        %v1334 = vmul.f32 %v1332, %v1332
        %v1335 = vmul.f32 %v1334, -0.001358992
        %v1336 = vadd.f32 %v1335, 0.041655596
        %v1337 = vmul.f32 %v1334, %v1336
        %v1338 = vadd.f32 %v1337, -0.4999988
        %v1339 = vmul.f32 %v1334, %v1338
        %v1340 = vadd.f32 1.0, %v1339
        %v1341 = vmul.f32 %v1332, %v1332
        %v1342 = vmul.f32 %v1341, -0.00019511016
        %v1343 = vadd.f32 %v1342, 0.008332121
        %v1344 = vmul.f32 %v1341, %v1343
        %v1345 = vadd.f32 %v1344, -0.16666654
        %v1346 = vmul.f32 %v1341, %v1345
        %v1347 = vadd.f32 %v1346, 1.0
        %v1348 = vmul.f32 %v1347, %v1332
        %vm1349 = vweird.f32 %v1048
        %v1350 = vadd.s32 %v1333, 3
        %v1351 = vand.u32 %v1350, 3
        %vm1352 = vcmp.lt.s32.totalorder %v1351, 2
        %vm1353 = vcmp.eq.s32.totalorder %v1351, 0
        %v1354 = vxor.u32 %v1348, 2147483648
        %v1355 = vsel %vm1353, %v1340, %v1354
        %vm1356 = vcmp.eq.s32.totalorder %v1351, 2
        %v1357 = vxor.u32 %v1340, 2147483648
        %v1358 = vsel %vm1356, %v1357, %v1348
        %v1359 = vsel %vm1352, %v1355, %v1358
        %v1360 = vsel %vm1349, nan, %v1359
        %v1361 = vand.u32 2147483647, %v1049
        %vm1362 = vcmp.le.f32.partialorder %v1361, 0.7853982
        %vm1363 = vcmp.lt.s32.totalorder %v1049, 0
        %v1364 = vand.u32 %v1049, 2139095040
        %v1365 = vshrl.u32 %v1364, 23
        %v1366 = vsub.s32 %v1365, 127
        %v1367 = vand.u32 2147483647, %v1049
        %v1368 = vand.u32 %v1367, 8388607
        %v1369 = vor.u32 %v1368, 8388608
        %v1370 = vsub.s32 0, %v1369
        %v1371 = vadd.s32 %v1366, 1
        %vm1372 = vcmp.gt.s32.totalorder %v1371, 0
        %v1373 = vsel %vm1372, %v1371, 0
        %v1374 = vshrl.u32 %v1373, 5
        %v1375 = vand.u32 %v1373, 31
        %v1376 = vsub.s32 32, %v1375
        %v1377 = vshrl.u32 683565275, %v1376
        %v1378 = vshll.u32 683565275, %v1375
        %v1379 = vshrl.u32 2475754826, %v1376
        %v1380 = vor.u32 %v1378, %v1379
        %v1381 = vshll.u32 2475754826, %v1375
        %v1382 = vshrl.u32 2131351028, %v1376
        %v1383 = vor.u32 %v1381, %v1382
        %v1384 = vshll.u32 2131351028, %v1375
        %v1385 = vshrl.u32 2102212464, %v1376
        %v1386 = vor.u32 %v1384, %v1385
        %v1387 = vshll.u32 2102212464, %v1375
        %v1388 = vshrl.u32 920167782, %v1376
        %v1389 = vor.u32 %v1387, %v1388
        %v1390 = vshll.u32 920167782, %v1375
        %v1391 = vshrl.u32 1326507024, %v1376
        %v1392 = vor.u32 %v1390, %v1391
        %vm1393 = vcmp.lt.s32.totalorder %v1374, 1
        %vm1394 = vcmp.lt.s32.totalorder %v1374, 2
        %vm1395 = vcmp.lt.s32.totalorder %v1374, 3
        %vm1396 = vcmp.lt.s32.totalorder %v1374, 4
        %v1397 = vsel %vm1393, %v1377, %v1380
        %v1398 = vsel %vm1396, %v1386, 2102212464
        %v1399 = vsel %vm1395, %v1383, %v1398
        %v1400 = vsel %vm1394, %v1397, %v1399
        %v1401 = vsel %vm1393, %v1380, %v1383
        %v1402 = vsel %vm1396, %v1389, 920167782
        %v1403 = vsel %vm1395, %v1386, %v1402
        %v1404 = vsel %vm1394, %v1401, %v1403
        %v1405 = vsel %vm1393, %v1383, %v1386
        %v1406 = vsel %vm1396, %v1392, 1326507024
        %v1407 = vsel %vm1395, %v1389, %v1406
        %v1408 = vsel %vm1394, %v1405, %v1407
        %v1409 = vshll.u32 %v1369, 8
        %v1410 = vand.u32 %v1409, 65535
        %v1411 = vshrl.u32 %v1409, 16
        %v1412 = vand.u32 %v1408, 65535
        %v1413 = vshrl.u32 %v1408, 16
        %v1414 = vmul.u32 %v1410, %v1412
        %v1415 = vmul.u32 %v1410, %v1413
        %v1416 = vmul.u32 %v1411, %v1412
        %v1417 = vmul.u32 %v1411, %v1413
        %v1418 = vshll.u32 %v1415, 16
        %v1419 = vshrl.u32 %v1415, 16
        %v1420 = vshll.u32 %v1416, 16
        %v1421 = vshrl.u32 %v1416, 16
        %vm1422 = vc.u32 %v1414, %v1418
        %v1423 = vsel %vm1422, 1, 0
        %v1424 = vadd.s32 %v1414, %v1418
        %v1425 = vadd.s32 %v1417, %v1423
        %vm1426 = vc.u32 %v1424, %v1420
        %v1427 = vsel %vm1426, 1, 0
        %v1428 = vadd.s32 %v1424, %v1420
        %v1429 = vadd.s32 %v1425, %v1427
        %v1430 = vadd.s32 %v1429, %v1419
        %v1431 = vadd.s32 %v1430, %v1421
        %v1432 = vand.u32 %v1409, 65535
        %v1433 = vshrl.u32 %v1409, 16
        %v1434 = vand.u32 %v1404, 65535
        %v1435 = vshrl.u32 %v1404, 16
        %v1436 = vmul.u32 %v1432, %v1434
        %v1437 = vmul.u32 %v1432, %v1435
        %v1438 = vmul.u32 %v1433, %v1434
        %v1439 = vmul.u32 %v1433, %v1435
        %v1440 = vshll.u32 %v1437, 16
        %v1441 = vshrl.u32 %v1437, 16
        %v1442 = vshll.u32 %v1438, 16
        %v1443 = vshrl.u32 %v1438, 16
        %vm1444 = vc.u32 %v1436, %v1440
        %v1445 = vsel %vm1444, 1, 0
        %v1446 = vadd.s32 %v1436, %v1440
        %v1447 = vadd.s32 %v1439, %v1445
        %vm1448 = vc.u32 %v1446, %v1442
        %v1449 = vsel %vm1448, 1, 0
        %v1450 = vadd.s32 %v1446, %v1442
        %v1451 = vadd.s32 %v1447, %v1449
        %v1452 = vadd.s32 %v1451, %v1441
        %v1453 = vadd.s32 %v1452, %v1443
        %v1454 = vmul.u32 %v1409, %v1400
        %v1455 = vadd.s32 %v1431, %v1450
        %vm1456 = vc.u32 %v1431, %v1450
        %v1457 = vadd.s32 %v1453, 1
        %v1458 = vsel %vm1456, %v1457, %v1453
        %v1459 = vadd.s32 %v1454, %v1458
        %v1460 = vadd.s32 %v1459, 536870912
        %v1461 = vshrl.u32 %v1460, 30
        %v1462 = vshll.u32 %v1461, 30
        %v1463 = vsub.s32 %v1459, %v1462
        %vm1464 = vcmp.lt.s32.totalorder %v1463, 0
        %v1465 = vsub.s32 0, %v1463
        %v1466 = vsel %vm1464, %v1465, %v1463
        %v1467 = vclz %v1466
        %v1468 = vsub.s32 %v1467, 2
        %vm1469 = vcmp.gt.s32.totalorder 0, %v1468
        %v1470 = vsel %vm1469, 0, %v1468
        %v1471 = vsub.s32 32, %v1470
        %v1472 = vshll.u32 %v1463, %v1470
        %v1473 = vshrl.u32 %v1455, %v1471
        %v1474 = vor.u32 %v1472, %v1473
        %v1475 = vsub.s32 4294967266, %v1470
        %v1476 = vadd.s32 %v1475, 127
        %v1477 = vshll.u32 %v1476, 23
        %v1478 = vor.u32 4788187, %v1477
        %v1479 = vand.u32 2147483647, %v1478
        %v1481 = vcvt.s32.f32 %v1474
        %v1482 = vmul.f32 %v1481, %v1479
        %v1483 = vxor.u32 %v1482, 2147483648
        %v1484 = vsel %vm1363, %v1483, %v1482
        %v1485 = vsub.s32 4, %v1461
        %v1486 = vsel %vm1363, %v1485, %v1461
        %v1487 = vsel %vm1362, %v1049, %v1484
        %v1488 = vsel %vm1362, 0, %v1486
        %v1489 = vmul.f32 %v1487, %v1487
        %v1490 = vmul.f32 %v1489, -0.001358992
        %v1491 = vadd.f32 %v1490, 0.041655596
        %v1492 = vmul.f32 %v1489, %v1491
        %v1493 = vadd.f32 %v1492, -0.4999988
        %v1494 = vmul.f32 %v1489, %v1493
        %v1495 = vadd.f32 1.0, %v1494
        %v1496 = vmul.f32 %v1487, %v1487
        %v1497 = vmul.f32 %v1496, -0.00019511016
        %v1498 = vadd.f32 %v1497, 0.008332121
        %v1499 = vmul.f32 %v1496, %v1498
        %v1500 = vadd.f32 %v1499, -0.16666654
        %v1501 = vmul.f32 %v1496, %v1500
        %v1502 = vadd.f32 %v1501, 1.0
        %v1503 = vmul.f32 %v1502, %v1487
        %vm1504 = vweird.f32 %v1049
        %v1505 = vadd.s32 %v1488, 3
        %v1506 = vand.u32 %v1505, 3
        %vm1507 = vcmp.lt.s32.totalorder %v1506, 2
        %vm1508 = vcmp.eq.s32.totalorder %v1506, 0
        %v1509 = vxor.u32 %v1503, 2147483648
        %v1510 = vsel %vm1508, %v1495, %v1509
        %vm1511 = vcmp.eq.s32.totalorder %v1506, 2
        %v1512 = vxor.u32 %v1495, 2147483648
        %v1513 = vsel %vm1511, %v1512, %v1503
        %v1514 = vsel %vm1507, %v1510, %v1513
        %v1515 = vsel %vm1504, nan, %v1514
        %v1516 = vand.u32 2147483647, %v1050
        %vm1517 = vcmp.le.f32.partialorder %v1516, 0.7853982
        %vm1518 = vcmp.lt.s32.totalorder %v1050, 0
        %v1519 = vand.u32 %v1050, 2139095040
        %v1520 = vshrl.u32 %v1519, 23
        %v1521 = vsub.s32 %v1520, 127
        %v1522 = vand.u32 2147483647, %v1050
        %v1523 = vand.u32 %v1522, 8388607
        %v1524 = vor.u32 %v1523, 8388608
        %v1525 = vsub.s32 0, %v1524
        %v1526 = vadd.s32 %v1521, 1
        %vm1527 = vcmp.gt.s32.totalorder %v1526, 0
        %v1528 = vsel %vm1527, %v1526, 0
        %v1529 = vshrl.u32 %v1528, 5
        %v1530 = vand.u32 %v1528, 31
        %v1531 = vsub.s32 32, %v1530
        %v1532 = vshrl.u32 683565275, %v1531
        %v1533 = vshll.u32 683565275, %v1530
        %v1534 = vshrl.u32 2475754826, %v1531
        %v1535 = vor.u32 %v1533, %v1534
        %v1536 = vshll.u32 2475754826, %v1530
        %v1537 = vshrl.u32 2131351028, %v1531
        %v1538 = vor.u32 %v1536, %v1537
        %v1539 = vshll.u32 2131351028, %v1530
        %v1540 = vshrl.u32 2102212464, %v1531
        %v1541 = vor.u32 %v1539, %v1540
        %v1542 = vshll.u32 2102212464, %v1530
        %v1543 = vshrl.u32 920167782, %v1531
        %v1544 = vor.u32 %v1542, %v1543
        %v1545 = vshll.u32 920167782, %v1530
        %v1546 = vshrl.u32 1326507024, %v1531
        %v1547 = vor.u32 %v1545, %v1546
        %vm1548 = vcmp.lt.s32.totalorder %v1529, 1
        %vm1549 = vcmp.lt.s32.totalorder %v1529, 2
        %vm1550 = vcmp.lt.s32.totalorder %v1529, 3
        %vm1551 = vcmp.lt.s32.totalorder %v1529, 4
        %v1552 = vsel %vm1548, %v1532, %v1535
        %v1553 = vsel %vm1551, %v1541, 2102212464
        %v1554 = vsel %vm1550, %v1538, %v1553
        %v1555 = vsel %vm1549, %v1552, %v1554
        %v1556 = vsel %vm1548, %v1535, %v1538
        %v1557 = vsel %vm1551, %v1544, 920167782
        %v1558 = vsel %vm1550, %v1541, %v1557
        %v1559 = vsel %vm1549, %v1556, %v1558
        %v1560 = vsel %vm1548, %v1538, %v1541
        %v1561 = vsel %vm1551, %v1547, 1326507024
        %v1562 = vsel %vm1550, %v1544, %v1561
        %v1563 = vsel %vm1549, %v1560, %v1562
        %v1564 = vshll.u32 %v1524, 8
        %v1565 = vand.u32 %v1564, 65535
        %v1566 = vshrl.u32 %v1564, 16
        %v1567 = vand.u32 %v1563, 65535
        %v1568 = vshrl.u32 %v1563, 16
        %v1569 = vmul.u32 %v1565, %v1567
        %v1570 = vmul.u32 %v1565, %v1568
        %v1571 = vmul.u32 %v1566, %v1567
        %v1572 = vmul.u32 %v1566, %v1568
        %v1573 = vshll.u32 %v1570, 16
        %v1574 = vshrl.u32 %v1570, 16
        %v1575 = vshll.u32 %v1571, 16
        %v1576 = vshrl.u32 %v1571, 16
        %vm1577 = vc.u32 %v1569, %v1573
        %v1578 = vsel %vm1577, 1, 0
        %v1579 = vadd.s32 %v1569, %v1573
        %v1580 = vadd.s32 %v1572, %v1578
        %vm1581 = vc.u32 %v1579, %v1575
        %v1582 = vsel %vm1581, 1, 0
        %v1583 = vadd.s32 %v1579, %v1575
        %v1584 = vadd.s32 %v1580, %v1582
        %v1585 = vadd.s32 %v1584, %v1574
        %v1586 = vadd.s32 %v1585, %v1576
        %v1587 = vand.u32 %v1564, 65535
        %v1588 = vshrl.u32 %v1564, 16
        %v1589 = vand.u32 %v1559, 65535
        %v1590 = vshrl.u32 %v1559, 16
        %v1591 = vmul.u32 %v1587, %v1589
        %v1592 = vmul.u32 %v1587, %v1590
        %v1593 = vmul.u32 %v1588, %v1589
        %v1594 = vmul.u32 %v1588, %v1590
        %v1595 = vshll.u32 %v1592, 16
        %v1596 = vshrl.u32 %v1592, 16
        %v1597 = vshll.u32 %v1593, 16
        %v1598 = vshrl.u32 %v1593, 16
        %vm1599 = vc.u32 %v1591, %v1595
        %v1600 = vsel %vm1599, 1, 0
        %v1601 = vadd.s32 %v1591, %v1595
        %v1602 = vadd.s32 %v1594, %v1600
        %vm1603 = vc.u32 %v1601, %v1597
        %v1604 = vsel %vm1603, 1, 0
        %v1605 = vadd.s32 %v1601, %v1597
        %v1606 = vadd.s32 %v1602, %v1604
        %v1607 = vadd.s32 %v1606, %v1596
        %v1608 = vadd.s32 %v1607, %v1598
        %v1609 = vmul.u32 %v1564, %v1555
        %v1610 = vadd.s32 %v1586, %v1605
        %vm1611 = vc.u32 %v1586, %v1605
        %v1612 = vadd.s32 %v1608, 1
        %v1613 = vsel %vm1611, %v1612, %v1608
        %v1614 = vadd.s32 %v1609, %v1613
        %v1615 = vadd.s32 %v1614, 536870912
        %v1616 = vshrl.u32 %v1615, 30
        %v1617 = vshll.u32 %v1616, 30
        %v1618 = vsub.s32 %v1614, %v1617
        %vm1619 = vcmp.lt.s32.totalorder %v1618, 0
        %v1620 = vsub.s32 0, %v1618
        %v1621 = vsel %vm1619, %v1620, %v1618
        %v1622 = vclz %v1621
        %v1623 = vsub.s32 %v1622, 2
        %vm1624 = vcmp.gt.s32.totalorder 0, %v1623
        %v1625 = vsel %vm1624, 0, %v1623
        %v1626 = vsub.s32 32, %v1625
        %v1627 = vshll.u32 %v1618, %v1625
        %v1628 = vshrl.u32 %v1610, %v1626
        %v1629 = vor.u32 %v1627, %v1628
        %v1630 = vsub.s32 4294967266, %v1625
        %v1631 = vadd.s32 %v1630, 127
        %v1632 = vshll.u32 %v1631, 23
        %v1633 = vor.u32 4788187, %v1632
        %v1634 = vand.u32 2147483647, %v1633
        %v1636 = vcvt.s32.f32 %v1629
        %v1637 = vmul.f32 %v1636, %v1634
        %v1638 = vxor.u32 %v1637, 2147483648
        %v1639 = vsel %vm1518, %v1638, %v1637
        %v1640 = vsub.s32 4, %v1616
        %v1641 = vsel %vm1518, %v1640, %v1616
        %v1642 = vsel %vm1517, %v1050, %v1639
        %v1643 = vsel %vm1517, 0, %v1641
        %v1644 = vmul.f32 %v1642, %v1642
        %v1645 = vmul.f32 %v1644, -0.001358992
        %v1646 = vadd.f32 %v1645, 0.041655596
        %v1647 = vmul.f32 %v1644, %v1646
        %v1648 = vadd.f32 %v1647, -0.4999988
        %v1649 = vmul.f32 %v1644, %v1648
        %v1650 = vadd.f32 1.0, %v1649
        %v1651 = vmul.f32 %v1642, %v1642
        %v1652 = vmul.f32 %v1651, -0.00019511016
        %v1653 = vadd.f32 %v1652, 0.008332121
        %v1654 = vmul.f32 %v1651, %v1653
        %v1655 = vadd.f32 %v1654, -0.16666654
        %v1656 = vmul.f32 %v1651, %v1655
        %v1657 = vadd.f32 %v1656, 1.0
        %v1658 = vmul.f32 %v1657, %v1642
        %vm1659 = vweird.f32 %v1050
        %v1660 = vadd.s32 %v1643, 3
        %v1661 = vand.u32 %v1660, 3
        %vm1662 = vcmp.lt.s32.totalorder %v1661, 2
        %vm1663 = vcmp.eq.s32.totalorder %v1661, 0
        %v1664 = vxor.u32 %v1658, 2147483648
        %v1665 = vsel %vm1663, %v1650, %v1664
        %vm1666 = vcmp.eq.s32.totalorder %v1661, 2
        %v1667 = vxor.u32 %v1650, 2147483648
        %v1668 = vsel %vm1666, %v1667, %v1658
        %v1669 = vsel %vm1662, %v1665, %v1668
        %v1670 = vsel %vm1659, nan, %v1669
        %v1671 = vld [vmem:[%s3] sm:$0x1]
        %v1672 = vmul.f32 %v1031, %v1031
        %v1673 = vmul.f32 %v1032, %v1032
        %v1674 = vmul.f32 %v1033, %v1033
        %v1675 = vmul.f32 %v1034, %v1034
        %v1677 = vperm.slane %v1671, 0
        %v1679 = vmul.f32 %v1677, %v1672
        %v1680 = vmul.f32 %v1677, %v1673
        %v1681 = vmul.f32 %v1677, %v1674
        %v1682 = vmul.f32 %v1677, %v1675
        %v1683 = vmul.f32 %v1679, 1.442695
        %v1684 = vpow.pop %v1683
        %v1685 = vmul.f32 %v1680, 1.442695
        %v1686 = vpow.pop %v1685
        %v1687 = vmul.f32 %v1681, 1.442695
        %v1688 = vpow.pop %v1687
        %v1689 = vmul.f32 %v1682, 1.442695
        %v1690 = vpow.pop %v1689
        %v1691 = vmul.f32 %v1205, %v1684
        %v1692 = vmul.f32 %v1360, %v1686
        %v1693 = vmul.f32 %v1515, %v1688
        %v1694 = vmul.f32 %v1670, %v1690
        %1695 = vst [vmem:[%s191] sm:$0xff] %v1691
        %1696 = vst [vmem:[%s191 + $0x8] sm:$0xff] %v1692
        %1697 = vst [vmem:[%s191 + $0x10] sm:$0xff] %v1693
        %1698 = vst [vmem:[%s191 + $0x18] sm:$0xff] %v1694
        %s1699 = sand.u32 %s115, 1
        %s1700 = scalar_lea.sflag [#allocation3], %s1699
        %s1701 = sand.u32 %s115, 1
        %s1702 = smul.addr %s1701, 32
        %s1703 = scalar_lea.vmem [#allocation2], %s1702
        // Predicated region
        $region37: #{tpu_custom_call.1} parent=35 // pred_check
          %p1704 = pneg %p125
        $region38: #{tpu_custom_call.1} parent=35 // pred_check_branch
          %1706 = sbr.rel (%p1704) target = $region40
        $region39: #{tpu_custom_call.1} parent=35 // pred_region
          %s1707 = smul.u32 4, %s18
          %1709 = vsyncadd %s1700, 0
          %s1710 = smul.addr %s1707, 8
          %s1711 = scalar_lea.hbm %s4, %s1710
          %s1712 = sshll.u32 %s1703, 4
          %s1713 = int_to_ptr.vmem [resolvable:$true] %s1712
          %s1714 = sshll.u32 %s1711, 4
          %s1715 = int_to_ptr.hbm [resolvable:$true] %s1714
          %1720 = dma.vmem_to_hbm [thread:$0]  %s1713, 512, %s1715, %s1700, 128, 128, 8
        $region40: #{tpu_custom_call.1} parent=35 // pred_fallthru
          _
      $region36: #{tpu_custom_call.1} parent=5 // pred_fallthru
        _
      %p1721 = scmp.le.s32.totalorder 2, %s13
      // Predicated region
      $region41: #{tpu_custom_call.1} parent=5 // pred_check
        %p1722 = pneg %p1721
      $region42: #{tpu_custom_call.1} parent=5 // pred_check_branch
        %1724 = sbr.rel (%p1722) target = $region44
      $region43: #{tpu_custom_call.1} parent=5 // pred_region
        %s1725 = ssub.s32 %s13, 2
        // Predicated region
        $region45: #{tpu_custom_call.1} parent=43 // pred_check
          %p1726 = pneg %p131
        $region46: #{tpu_custom_call.1} parent=43 // pred_check_branch
          %1728 = sbr.rel (%p1726) target = $region48
        $region47: #{tpu_custom_call.1} parent=43 // pred_region
          %s1729 = sand.u32 %s116, 1
          %s1730 = scalar_lea.sflag [#allocation3], %s1729
          %s1731 = sand.u32 %s116, 1
          %s1732 = smul.addr %s1731, 32
          %s1733 = scalar_lea.vmem [#allocation2], %s1732
          %1735 = dma.done %s1730, 512
        $region48: #{tpu_custom_call.1} parent=43 // pred_fallthru
          _
      $region44: #{tpu_custom_call.1} parent=5 // pred_fallthru
        _
    $region6: #{tpu_custom_call.1} parent=1 // loop_footer
      %s17 = sadd.s32 1, %s13
    $region7: #{tpu_custom_call.1} parent=1 // loop_footer_branch
      %12 = sbr.rel target = $region3
    $region8: #{tpu_custom_call.1} parent=1 // loop_exit
      _
    %1736 = vsyncpa [#allocation3], 1
    %s1737 = scalar_lea.sflag [#allocation3], 1
    %1738 = vsyncpa %s1737, 1

</llo_original>
